<compile_context>
chip_gen: v5e
topology: v5e:2x2
jax: 0.10.0
libtpu: 0.0.40
codegen_flags: <defaults>
</compile_context>

<pallas_src>
import jax
import jax.numpy as jnp
from jax.experimental import pallas as pl
from jax.experimental.pallas import tpu as pltpu

LANE = 128  # TPU lane width


def _round_up(x, m):
    return ((x + m - 1) // m) * m


# ----------------------------------------------------------------------------
# Fused VAE forward kernel (one batch tile per grid step):
#   h        = x @ W_enc + b_enc          (W_enc = [W_mu | W_logvar], one MXU dot)
#   mu, lv   = split(h)
#   z        = mu + exp(0.5 * lv) * eps   (VPU / EUP, f32)
#   recon    = z @ W_dec + b_dec          (MXU dot, f32 accumulation)
# ----------------------------------------------------------------------------
def _vae_fwd_kernel(x_ref, w_enc_ref, b_enc_ref, w_dec_ref, b_dec_ref, eps_ref,
                    recon_ref, mu_ref, logvar_ref):
    lp = mu_ref.shape[-1]                       # padded latent dim (multiple of 128)

    x = x_ref[...]                              # [TB, D] bf16

    # Single fused encoder matmul on the MXU (bf16 inputs, f32 accumulation).
    h = jnp.dot(x, w_enc_ref[...], preferred_element_type=jnp.float32)  # [TB, 2*Lp]
    h = h + b_enc_ref[...]                      # f32 bias add

    mu = h[:, :lp]                              # [TB, Lp]
    logvar = h[:, lp:]                          # [TB, Lp]

    # Reparameterization (f32 elementwise; exp goes to the EUP).
    std = jnp.exp(0.5 * logvar)
    z = mu + std * eps_ref[...]

    # Decoder matmul (bf16 inputs, f32 accumulation).
    recon = jnp.dot(z.astype(w_dec_ref.dtype), w_dec_ref[...],
                    preferred_element_type=jnp.float32)                 # [TB, D]
    recon = recon + b_dec_ref[...]

    recon_ref[...] = recon.astype(recon_ref.dtype)
    mu_ref[...] = mu.astype(mu_ref.dtype)
    logvar_ref[...] = logvar.astype(logvar_ref.dtype)


def pack_params(params):
    """One-time setup: fuse encoder weights, lane-pad latent dim, cast to bf16."""
    D, L = params["w_mu"].shape
    Lp = _round_up(L, LANE)

    w_mu = jnp.zeros((D, Lp), jnp.float32).at[:, :L].set(params["w_mu"])
    w_lv = jnp.zeros((D, Lp), jnp.float32).at[:, :L].set(params["w_lv"])
    w_enc = jnp.concatenate([w_mu, w_lv], axis=1).astype(jnp.bfloat16)   # [D, 2*Lp]

    b_mu = jnp.zeros((1, Lp), jnp.float32).at[:, :L].set(params["b_mu"])
    b_lv = jnp.zeros((1, Lp), jnp.float32).at[:, :L].set(params["b_lv"])
    b_enc = jnp.concatenate([b_mu, b_lv], axis=1)                        # [1, 2*Lp] f32

    w_dec = jnp.zeros((Lp, D), jnp.float32).at[:L, :].set(params["w_dec"])
    w_dec = w_dec.astype(jnp.bfloat16)                                   # [Lp, D]
    b_dec = params["b_dec"].astype(jnp.float32)                          # [1, D]

    return {"w_enc": w_enc, "b_enc": b_enc, "w_dec": w_dec, "b_dec": b_dec,
            "latent_dim": L, "latent_pad": Lp}


def vae_forward(x_nchw, packed, eps):
    """Concrete BaseVAE forward: returns (reconstruction [NCHW], mu, logvar)."""
    B, C, H, W = x_nchw.shape
    D = C * H * W
    L = packed["latent_dim"]
    Lp = packed["latent_pad"]

    # Batch tiling: tile aligned to the bf16 sublane tile (16); pad B up to it.
    tile_b = 128 if B >= 128 else _round_up(max(B, 1), 16)
    B_pad = _round_up(B, tile_b)
    grid = (B_pad // tile_b,)

    x_flat = x_nchw.reshape(B, D).astype(jnp.bfloat16)
    if B_pad != B:
        x_flat = jnp.pad(x_flat, ((0, B_pad - B), (0, 0)))
    eps_pad = jnp.zeros((B_pad, Lp), jnp.float32).at[:B, :L].set(
        eps.astype(jnp.float32))

    # VMEM budget: double-buffered batch tiles + (resident) weights, with headroom.
    per_tile = (tile_b * D * 2          # x (bf16)
                + tile_b * Lp * 4       # eps (f32)
                + tile_b * D * 4        # recon (f32)
                + 2 * tile_b * Lp * 4)  # mu, logvar (f32)
    weights = D * (2 * Lp) * 2 + Lp * D * 2 + (2 * Lp) * 4 + D * 4
    est = 2 * (per_tile + weights)      # count everything double-buffered
    vmem_limit = min(max(2 * est, 16 << 20), 48 << 20)  # stay under v7x's 64 MiB

    recon_flat, mu_pad, logvar_pad = pl.pallas_call(
        _vae_fwd_kernel,
        out_shape=(
            jax.ShapeDtypeStruct((B_pad, D), jnp.float32),
            jax.ShapeDtypeStruct((B_pad, Lp), jnp.float32),
            jax.ShapeDtypeStruct((B_pad, Lp), jnp.float32),
        ),
        grid_spec=pltpu.PrefetchScalarGridSpec(
            num_scalar_prefetch=0,
            grid=grid,
            in_specs=[
                pl.BlockSpec((tile_b, D), lambda i: (i, 0)),     # x tile
                pl.BlockSpec((D, 2 * Lp), lambda i: (0, 0)),     # W_enc (VMEM-resident)
                pl.BlockSpec((1, 2 * Lp), lambda i: (0, 0)),     # b_enc
                pl.BlockSpec((Lp, D), lambda i: (0, 0)),         # W_dec (VMEM-resident)
                pl.BlockSpec((1, D), lambda i: (0, 0)),          # b_dec
                pl.BlockSpec((tile_b, Lp), lambda i: (i, 0)),    # eps tile
            ],
            out_specs=(
                pl.BlockSpec((tile_b, D), lambda i: (i, 0)),     # recon tile
                pl.BlockSpec((tile_b, Lp), lambda i: (i, 0)),    # mu tile
                pl.BlockSpec((tile_b, Lp), lambda i: (i, 0)),    # logvar tile
            ),
        ),
        compiler_params=pltpu.CompilerParams(
            dimension_semantics=("parallel",),   # megacore-shard batch on v7x
            vmem_limit_bytes=vmem_limit,
        ),
    )(x_flat, packed["w_enc"], packed["b_enc"],
      packed["w_dec"], packed["b_dec"], eps_pad)

    recon = recon_flat[:B].reshape(B, C, H, W)
    mu = mu_pad[:B, :L]
    logvar = logvar_pad[:B, :L]
    return recon, mu, logvar


def init_params(key, in_dim, latent_dim):
    """Deterministic synthetic parameters (shapes implied by the VAE interface)."""
    k1, k2, k3 = jax.random.split(key, 3)
    scale_enc = 1.0 / jnp.sqrt(jnp.float32(in_dim))
    scale_dec = 1.0 / jnp.sqrt(jnp.float32(latent_dim))
    return {
        "w_mu":  jax.random.normal(k1, (in_dim, latent_dim), jnp.float32) * scale_enc,
        "b_mu":  jnp.zeros((1, latent_dim), jnp.float32),
        "w_lv":  jax.random.normal(k2, (in_dim, latent_dim), jnp.float32) * scale_enc,
        "b_lv":  jnp.zeros((1, latent_dim), jnp.float32),
        "w_dec": jax.random.normal(k3, (latent_dim, in_dim), jnp.float32) * scale_dec,
        "b_dec": jnp.zeros((1, in_dim), jnp.float32),
    }


if __name__ == "__main__":
    key = jax.random.PRNGKey(0)
    k_x, k_p, k_eps = jax.random.split(key, 3)

    # Small NCHW input consistent with a VAE image module.
    B, C, H, W = 2, 4, 16, 16
    latent_dim = 32
    D = C * H * W

    x = jax.random.normal(k_x, (B, C, H, W), jnp.float32)
    params = init_params(k_p, D, latent_dim)
    packed = pack_params(params)
    eps = jax.random.normal(k_eps, (B, latent_dim), jnp.float32)

    recon, mu, logvar = vae_forward(x, packed, eps)
    jax.block_until_ready((recon, mu, logvar))

    # Reference in plain JAX, matching the kernel's bf16-matmul / f32-accumulate math.
    x_flat = x.reshape(B, D).astype(jnp.bfloat16)
    w_mu_bf = params["w_mu"].astype(jnp.bfloat16)
    w_lv_bf = params["w_lv"].astype(jnp.bfloat16)
    w_dec_bf = params["w_dec"].astype(jnp.bfloat16)
    mu_ref = jnp.dot(x_flat, w_mu_bf, preferred_element_type=jnp.float32) + params["b_mu"]
    lv_ref = jnp.dot(x_flat, w_lv_bf, preferred_element_type=jnp.float32) + params["b_lv"]
    z_ref = (mu_ref + jnp.exp(0.5 * lv_ref) * eps).astype(jnp.bfloat16)
    recon_ref = (jnp.dot(z_ref, w_dec_bf, preferred_element_type=jnp.float32)
                 + params["b_dec"]).reshape(B, C, H, W)

    assert recon.shape == (B, C, H, W)
    assert mu.shape == (B, latent_dim) and logvar.shape == (B, latent_dim)
    assert jnp.allclose(mu, mu_ref, atol=1e-2, rtol=1e-2)
    assert jnp.allclose(logvar, lv_ref, atol=1e-2, rtol=1e-2)
    assert jnp.allclose(recon, recon_ref, atol=1e-2, rtol=1e-2)

    print("KERNEL_OK")
</pallas_src>

<mosaic_0001>
module attributes {stable_mosaic.version = 11 : i64} {
  func.func @_vae_fwd_kernel(%arg0: i32, %arg1: memref<16x1024xbf16, #tpu.memory_space<vmem>>, %arg2: memref<1024x256xbf16, #tpu.memory_space<vmem>>, %arg3: memref<1x256xf32, #tpu.memory_space<vmem>>, %arg4: memref<128x1024xbf16, #tpu.memory_space<vmem>>, %arg5: memref<1x1024xf32, #tpu.memory_space<vmem>>, %arg6: memref<16x128xf32, #tpu.memory_space<vmem>>, %arg7: memref<16x1024xf32, #tpu.memory_space<vmem>>, %arg8: memref<16x128xf32, #tpu.memory_space<vmem>>, %arg9: memref<16x128xf32, #tpu.memory_space<vmem>>) attributes {dimension_semantics = [#tpu.dimension_semantics<parallel>], iteration_bounds = array<i64: 1>, scalar_prefetch = 0 : i64, scratch_operands = 0 : i64, tpu.core_type = #tpu.core_type<tc>, window_params = [{transform_indices = @transform_0, window_bounds = array<i64: 16, 1024>}, {pipeline_mode = #tpu.pipeline_mode<synchronous>, transform_indices = @transform_1, window_bounds = array<i64: 1024, 256>}, {pipeline_mode = #tpu.pipeline_mode<synchronous>, transform_indices = @transform_2, window_bounds = array<i64: 1, 256>}, {pipeline_mode = #tpu.pipeline_mode<synchronous>, transform_indices = @transform_3, window_bounds = array<i64: 128, 1024>}, {pipeline_mode = #tpu.pipeline_mode<synchronous>, transform_indices = @transform_4, window_bounds = array<i64: 1, 1024>}, {transform_indices = @transform_5, window_bounds = array<i64: 16, 128>}, {transform_indices = @transform_6, window_bounds = array<i64: 16, 1024>}, {transform_indices = @transform_7, window_bounds = array<i64: 16, 128>}, {transform_indices = @transform_8, window_bounds = array<i64: 16, 128>}]} {
    %c0 = arith.constant 0 : index
    %c0_0 = arith.constant 0 : index
    %0 = vector.load %arg1[%c0, %c0_0] : memref<16x1024xbf16, #tpu.memory_space<vmem>>, vector<16x1024xbf16>
    %c0_1 = arith.constant 0 : index
    %c0_2 = arith.constant 0 : index
    %1 = vector.load %arg2[%c0_1, %c0_2] : memref<1024x256xbf16, #tpu.memory_space<vmem>>, vector<1024x256xbf16>
    %cst = arith.constant dense<0.000000e+00> : vector<16x256xf32>
    %2 = tpu.matmul %0, %1, %cst {dimension_numbers = #tpu.dot_dimension_numbers<[1], [0], [0], [1], [0, 0, 1, 1], [], []>} : vector<16x1024xbf16>, vector<1024x256xbf16>, vector<16x256xf32> -> vector<16x256xf32>
    %c0_3 = arith.constant 0 : index
    %c0_4 = arith.constant 0 : index
    %3 = vector.load %arg3[%c0_3, %c0_4] : memref<1x256xf32, #tpu.memory_space<vmem>>, vector<1x256xf32>
    %4 = vector.broadcast %3 : vector<1x256xf32> to vector<16x256xf32>
    %5 = arith.addf %2, %4 : vector<16x256xf32>
    %6 = vector.extract_strided_slice %5 {offsets = [0, 0], sizes = [16, 128], strides = [1, 1]} : vector<16x256xf32> to vector<16x128xf32>
    %7 = vector.extract_strided_slice %5 {offsets = [0, 128], sizes = [16, 128], strides = [1, 1]} : vector<16x256xf32> to vector<16x128xf32>
    %cst_5 = arith.constant 5.000000e-01 : f32
    %8 = vector.broadcast %cst_5 : f32 to vector<16x128xf32>
    %9 = arith.mulf %8, %7 : vector<16x128xf32>
    %10 = math.exp %9 : vector<16x128xf32>
    %c0_6 = arith.constant 0 : index
    %c0_7 = arith.constant 0 : index
    %11 = vector.load %arg6[%c0_6, %c0_7] : memref<16x128xf32, #tpu.memory_space<vmem>>, vector<16x128xf32>
    %12 = arith.mulf %10, %11 : vector<16x128xf32>
    %13 = arith.addf %6, %12 : vector<16x128xf32>
    %14 = arith.truncf %13 : vector<16x128xf32> to vector<16x128xbf16>
    %c0_8 = arith.constant 0 : index
    %c0_9 = arith.constant 0 : index
    %15 = vector.load %arg4[%c0_8, %c0_9] : memref<128x1024xbf16, #tpu.memory_space<vmem>>, vector<128x1024xbf16>
    %cst_10 = arith.constant dense<0.000000e+00> : vector<16x1024xf32>
    %16 = tpu.matmul %14, %15, %cst_10 {dimension_numbers = #tpu.dot_dimension_numbers<[1], [0], [0], [1], [0, 0, 1, 1], [], []>} : vector<16x128xbf16>, vector<128x1024xbf16>, vector<16x1024xf32> -> vector<16x1024xf32>
    %c0_11 = arith.constant 0 : index
    %c0_12 = arith.constant 0 : index
    %17 = vector.load %arg5[%c0_11, %c0_12] : memref<1x1024xf32, #tpu.memory_space<vmem>>, vector<1x1024xf32>
    %18 = vector.broadcast %17 : vector<1x1024xf32> to vector<16x1024xf32>
    %19 = arith.addf %16, %18 : vector<16x1024xf32>
    %c0_13 = arith.constant 0 : index
    %c0_14 = arith.constant 0 : index
    %20 = vector.load %arg7[%c0_13, %c0_14] : memref<16x1024xf32, #tpu.memory_space<vmem>>, vector<16x1024xf32>
    tpu.vector_store %arg7[%c0_13, %c0_14], %19 {strides = array<i32>} : memref<16x1024xf32, #tpu.memory_space<vmem>>, vector<16x1024xf32>,
    %c0_15 = arith.constant 0 : index
    %c0_16 = arith.constant 0 : index
    %21 = vector.load %arg8[%c0_15, %c0_16] : memref<16x128xf32, #tpu.memory_space<vmem>>, vector<16x128xf32>
    tpu.vector_store %arg8[%c0_15, %c0_16], %6 {strides = array<i32>} : memref<16x128xf32, #tpu.memory_space<vmem>>, vector<16x128xf32>,
    %c0_17 = arith.constant 0 : index
    %c0_18 = arith.constant 0 : index
    %22 = vector.load %arg9[%c0_17, %c0_18] : memref<16x128xf32, #tpu.memory_space<vmem>>, vector<16x128xf32>
    tpu.vector_store %arg9[%c0_17, %c0_18], %7 {strides = array<i32>} : memref<16x128xf32, #tpu.memory_space<vmem>>, vector<16x128xf32>,
    return
  }
  func.func @transform_0(%arg0: i32) -> (i32, i32) {
    %c0_i32 = arith.constant 0 : i32
    %c0_i32_0 = arith.constant 0 : i32
    return %arg0, %c0_i32 : i32, i32
  }
  func.func @transform_1(%arg0: i32) -> (i32, i32) {
    %c0_i32 = arith.constant 0 : i32
    %c0_i32_0 = arith.constant 0 : i32
    %c0_i32_1 = arith.constant 0 : i32
    return %c0_i32, %c0_i32_0 : i32, i32
  }
  func.func @transform_2(%arg0: i32) -> (i32, i32) {
    %c0_i32 = arith.constant 0 : i32
    %c0_i32_0 = arith.constant 0 : i32
    %c0_i32_1 = arith.constant 0 : i32
    return %c0_i32, %c0_i32_0 : i32, i32
  }
  func.func @transform_3(%arg0: i32) -> (i32, i32) {
    %c0_i32 = arith.constant 0 : i32
    %c0_i32_0 = arith.constant 0 : i32
    %c0_i32_1 = arith.constant 0 : i32
    return %c0_i32, %c0_i32_0 : i32, i32
  }
  func.func @transform_4(%arg0: i32) -> (i32, i32) {
    %c0_i32 = arith.constant 0 : i32
    %c0_i32_0 = arith.constant 0 : i32
    %c0_i32_1 = arith.constant 0 : i32
    return %c0_i32, %c0_i32_0 : i32, i32
  }
  func.func @transform_5(%arg0: i32) -> (i32, i32) {
    %c0_i32 = arith.constant 0 : i32
    %c0_i32_0 = arith.constant 0 : i32
    return %arg0, %c0_i32 : i32, i32
  }
  func.func @transform_6(%arg0: i32) -> (i32, i32) {
    %c0_i32 = arith.constant 0 : i32
    %c0_i32_0 = arith.constant 0 : i32
    return %arg0, %c0_i32 : i32, i32
  }
  func.func @transform_7(%arg0: i32) -> (i32, i32) {
    %c0_i32 = arith.constant 0 : i32
    %c0_i32_0 = arith.constant 0 : i32
    return %arg0, %c0_i32 : i32, i32
  }
  func.func @transform_8(%arg0: i32) -> (i32, i32) {
    %c0_i32 = arith.constant 0 : i32
    %c0_i32_0 = arith.constant 0 : i32
    return %arg0, %c0_i32 : i32, i32
  }
}

</mosaic_0001>

<llo_original>
// kernel: tpu_custom_call.1
$region0: #{tpu_custom_call.1}
  #allocation0 [shape = 'u32[]', space=smem, size = 0x4, offset = 0x4, fixed_abs, tag = 'smem constant byte address 0x4 - core index']
  #allocation1 [shape = 'u32[72,128]{1,0:T(1,128)}', space=vmem, size = 0x9000, scoped, tag = 'internal scratch']
  %s0 = inlined_call_operand.hbm [shape: bf16[16,1024], index: 0, kind: input, shape index: {}]
  %s1 = inlined_call_operand.hbm [shape: bf16[1024,256], index: 1, kind: input, shape index: {}]
  %s2 = inlined_call_operand.hbm [shape: f32[1,256], index: 2, kind: input, shape index: {}]
  %s3 = inlined_call_operand.hbm [shape: bf16[128,1024], index: 3, kind: input, shape index: {}]
  %s4 = inlined_call_operand.hbm [shape: f32[1,1024], index: 4, kind: input, shape index: {}]
  %s5 = inlined_call_operand.hbm [shape: f32[16,128], index: 5, kind: input, shape index: {}]
  %s6 = inlined_call_operand.hbm [shape: f32[16,1024], index: 6, kind: output, shape index: {0}]
  %s7 = inlined_call_operand.hbm [shape: f32[16,128], index: 7, kind: output, shape index: {1}]
  %s8 = inlined_call_operand.hbm [shape: f32[16,128], index: 8, kind: output, shape index: {2}]
  %9 = xla_tuple %s6, %s7, %s8
  %s10 = sld [smem:[#allocation0]]
  $region74: #{tpu_custom_call.1} parent=0
    _
  %s12 = ssub.s32 1, %s10
  %s13 = scalar_select 0, %s12, %s10
  $region1: #{tpu_custom_call.1} parent=0
    #allocation2 [shape = 'u8[32768]{0}', space=vmem, size = 0x8000, scoped, tag = 'input window, operand 0, single buffered']
    #allocation3 [shape = 's32[1]{0}', space=sflag, size = 0x4, scoped, tag = 'scoped memory for tpu_custom_call.1']
    #allocation4 [shape = 's32[1]{0}', space=sflag, size = 0x4, scoped, tag = 'scoped memory for tpu_custom_call.1']
    #allocation5 [shape = 'u8[524288]{0}', space=vmem, size = 0x80000, scoped, tag = 'input window, operand 1, single buffered']
    #allocation6 [shape = 's32[1]{0}', space=sflag, size = 0x4, scoped, tag = 'scoped memory for tpu_custom_call.1']
    #allocation7 [shape = 'u8[1024]{0}', space=vmem, size = 0x400, scoped, tag = 'input window, operand 2, single buffered']
    #allocation8 [shape = 'u8[262144]{0}', space=vmem, size = 0x40000, scoped, tag = 'input window, operand 3, single buffered']
    #allocation9 [shape = 's32[1]{0}', space=sflag, size = 0x4, scoped, tag = 'scoped memory for tpu_custom_call.1']
    #allocation10 [shape = 'u8[4096]{0}', space=vmem, size = 0x1000, scoped, tag = 'input window, operand 4, single buffered']
    #allocation11 [shape = 'u8[8192]{0}', space=vmem, size = 0x2000, scoped, tag = 'input window, operand 5, single buffered']
    #allocation12 [shape = 's32[1]{0}', space=sflag, size = 0x4, scoped, tag = 'scoped memory for tpu_custom_call.1']
    #allocation13 [shape = 'u8[65536]{0}', space=vmem, size = 0x10000, scoped, tag = 'output window, operand 0, single buffered']
    #allocation14 [shape = 'u8[8192]{0}', space=vmem, size = 0x2000, scoped, tag = 'output window, operand 1, single buffered']
    #allocation15 [shape = 's32[1]{0}', space=sflag, size = 0x4, scoped, tag = 'scoped memory for tpu_custom_call.1']
    #allocation16 [shape = 'u8[8192]{0}', space=vmem, size = 0x2000, scoped, tag = 'output window, operand 2, single buffered']
    %14 = vsyncpa [#allocation3], 0
    %15 = vsyncpa [#allocation6], 0
    %16 = vsyncpa [#allocation9], 0
    %17 = vsyncpa [#allocation12], 0
    %18 = vsyncpa [#allocation4], 0
    %19 = vsyncpa [#allocation15], 0
    // Predicated region
    $region2: #{tpu_custom_call.1} parent=1 // pred_check
      _
    $region3: #{tpu_custom_call.1} parent=1 // pred_check_branch
      %21 = sbr.rel (0) target = $region5
    $region4: #{tpu_custom_call.1} parent=1 // pred_region
      %23 = vsyncadd [#allocation3], 0
      %s24 = sshll.u32 %s0, 4
      %s25 = int_to_ptr.hbm [resolvable:$true] %s24
      %s26 = sshll.u32 [#allocation2], 4
      %s27 = int_to_ptr.vmem [resolvable:$true] %s26
      %32 = dma.hbm_to_vmem [thread:$0]  %s25, 1024, %s27, [#allocation3], 512, 512, 32
    $region5: #{tpu_custom_call.1} parent=1 // pred_fallthru
      _
    // Predicated region
    $region6: #{tpu_custom_call.1} parent=1 // pred_check
      _
    $region7: #{tpu_custom_call.1} parent=1 // pred_check_branch
      %34 = sbr.rel (0) target = $region9
    $region8: #{tpu_custom_call.1} parent=1 // pred_region
      %36 = vsyncadd [#allocation6], 0
      %s37 = sshll.u32 %s1, 4
      %s38 = int_to_ptr.hbm [resolvable:$true] %s37
      %s39 = sshll.u32 [#allocation5], 4
      %s40 = int_to_ptr.vmem [resolvable:$true] %s39
      %45 = dma.hbm_to_vmem [thread:$0]  %s38, 16384, %s40, [#allocation6], 128, 128, 8
    $region9: #{tpu_custom_call.1} parent=1 // pred_fallthru
      _
    // Predicated region
    $region10: #{tpu_custom_call.1} parent=1 // pred_check
      _
    $region11: #{tpu_custom_call.1} parent=1 // pred_check_branch
      %47 = sbr.rel (0) target = $region13
    $region12: #{tpu_custom_call.1} parent=1 // pred_region
      %49 = vsyncadd [#allocation6], 0
      %s51 = sshll.u32 %s2, 4
      %s52 = int_to_ptr.hbm [resolvable:$true] %s51
      %s53 = sshll.u32 [#allocation7], 4
      %s54 = int_to_ptr.vmem [resolvable:$true] %s53
      %56 = dma.hbm_to_vmem [thread:$0]  %s52, 32, %s54, [#allocation6]
    $region13: #{tpu_custom_call.1} parent=1 // pred_fallthru
      _
    // Predicated region
    $region14: #{tpu_custom_call.1} parent=1 // pred_check
      _
    $region15: #{tpu_custom_call.1} parent=1 // pred_check_branch
      %58 = sbr.rel (0) target = $region17
    $region16: #{tpu_custom_call.1} parent=1 // pred_region
      %60 = vsyncadd [#allocation9], 0
      %s61 = sshll.u32 %s3, 4
      %s62 = int_to_ptr.hbm [resolvable:$true] %s61
      %s63 = sshll.u32 [#allocation8], 4
      %s64 = int_to_ptr.vmem [resolvable:$true] %s63
      %69 = dma.hbm_to_vmem [thread:$0]  %s62, 8192, %s64, [#allocation9], 512, 512, 32
    $region17: #{tpu_custom_call.1} parent=1 // pred_fallthru
      _
    // Predicated region
    $region18: #{tpu_custom_call.1} parent=1 // pred_check
      _
    $region19: #{tpu_custom_call.1} parent=1 // pred_check_branch
      %71 = sbr.rel (0) target = $region21
    $region20: #{tpu_custom_call.1} parent=1 // pred_region
      %73 = vsyncadd [#allocation9], 0
      %s75 = sshll.u32 %s4, 4
      %s76 = int_to_ptr.hbm [resolvable:$true] %s75
      %s77 = sshll.u32 [#allocation10], 4
      %s78 = int_to_ptr.vmem [resolvable:$true] %s77
      %80 = dma.hbm_to_vmem [thread:$0]  %s76, 128, %s78, [#allocation9]
    $region21: #{tpu_custom_call.1} parent=1 // pred_fallthru
      _
    // Predicated region
    $region22: #{tpu_custom_call.1} parent=1 // pred_check
      _
    $region23: #{tpu_custom_call.1} parent=1 // pred_check_branch
      %82 = sbr.rel (0) target = $region25
    $region24: #{tpu_custom_call.1} parent=1 // pred_region
      %84 = vsyncadd [#allocation12], 0
      %s85 = sshll.u32 %s5, 4
      %s86 = int_to_ptr.hbm [resolvable:$true] %s85
      %s87 = sshll.u32 [#allocation11], 4
      %s88 = int_to_ptr.vmem [resolvable:$true] %s87
      %93 = dma.hbm_to_vmem [thread:$0]  %s86, 256, %s88, [#allocation12], 128, 128, 8
    $region25: #{tpu_custom_call.1} parent=1 // pred_fallthru
      _
    // Predicated region
    $region26: #{tpu_custom_call.1} parent=1 // pred_check
      _
    $region27: #{tpu_custom_call.1} parent=1 // pred_check_branch
      %95 = sbr.rel (0) target = $region29
    $region28: #{tpu_custom_call.1} parent=1 // pred_region
      %97 = dma.done [#allocation3], 1024
    $region29: #{tpu_custom_call.1} parent=1 // pred_fallthru
      _
    // Predicated region
    $region30: #{tpu_custom_call.1} parent=1 // pred_check
      _
    $region31: #{tpu_custom_call.1} parent=1 // pred_check_branch
      %99 = sbr.rel (0) target = $region33
    $region32: #{tpu_custom_call.1} parent=1 // pred_region
      %101 = dma.done [#allocation6], 16384
    $region33: #{tpu_custom_call.1} parent=1 // pred_fallthru
      _
    // Predicated region
    $region34: #{tpu_custom_call.1} parent=1 // pred_check
      _
    $region35: #{tpu_custom_call.1} parent=1 // pred_check_branch
      %103 = sbr.rel (0) target = $region37
    $region36: #{tpu_custom_call.1} parent=1 // pred_region
      %105 = dma.done [#allocation6], 32
    $region37: #{tpu_custom_call.1} parent=1 // pred_fallthru
      _
    // Predicated region
    $region38: #{tpu_custom_call.1} parent=1 // pred_check
      _
    $region39: #{tpu_custom_call.1} parent=1 // pred_check_branch
      %107 = sbr.rel (0) target = $region41
    $region40: #{tpu_custom_call.1} parent=1 // pred_region
      %109 = dma.done [#allocation9], 8192
    $region41: #{tpu_custom_call.1} parent=1 // pred_fallthru
      _
    // Predicated region
    $region42: #{tpu_custom_call.1} parent=1 // pred_check
      _
    $region43: #{tpu_custom_call.1} parent=1 // pred_check_branch
      %111 = sbr.rel (0) target = $region45
    $region44: #{tpu_custom_call.1} parent=1 // pred_region
      %113 = dma.done [#allocation9], 128
    $region45: #{tpu_custom_call.1} parent=1 // pred_fallthru
      _
    // Predicated region
    $region46: #{tpu_custom_call.1} parent=1 // pred_check
      _
    $region47: #{tpu_custom_call.1} parent=1 // pred_check_branch
      %115 = sbr.rel (0) target = $region49
    $region48: #{tpu_custom_call.1} parent=1 // pred_region
      %117 = dma.done [#allocation12], 256
    $region49: #{tpu_custom_call.1} parent=1 // pred_fallthru
      _
    %v118 = vld [vmem:[#allocation2] sm:$0xff]
    %v119 = vld [vmem:[#allocation2 + $0x8] sm:$0xff]
    %v120 = vld [vmem:[#allocation2 + $0x10] sm:$0xff]
    %v121 = vld [vmem:[#allocation2 + $0x18] sm:$0xff]
    %v122 = vld [vmem:[#allocation2 + $0x20] sm:$0xff]
    %v123 = vld [vmem:[#allocation2 + $0x28] sm:$0xff]
    %v124 = vld [vmem:[#allocation2 + $0x30] sm:$0xff]
    %v125 = vld [vmem:[#allocation2 + $0x38] sm:$0xff]
    %v126 = vld [vmem:[#allocation5] sm:$0xff]
    %v127 = vld [vmem:[#allocation5 + $0x8] sm:$0xff]
    %v128 = vld [vmem:[#allocation5 + $0x10] sm:$0xff]
    %v129 = vld [vmem:[#allocation5 + $0x18] sm:$0xff]
    %v130 = vld [vmem:[#allocation5 + $0x20] sm:$0xff]
    %v131 = vld [vmem:[#allocation5 + $0x28] sm:$0xff]
    %v132 = vld [vmem:[#allocation5 + $0x30] sm:$0xff]
    %v133 = vld [vmem:[#allocation5 + $0x38] sm:$0xff]
    %v134 = vld [vmem:[#allocation5 + $0x40] sm:$0xff]
    %v135 = vld [vmem:[#allocation5 + $0x48] sm:$0xff]
    %v136 = vld [vmem:[#allocation5 + $0x50] sm:$0xff]
    %v137 = vld [vmem:[#allocation5 + $0x58] sm:$0xff]
    %v138 = vld [vmem:[#allocation5 + $0x60] sm:$0xff]
    %v139 = vld [vmem:[#allocation5 + $0x68] sm:$0xff]
    %v140 = vld [vmem:[#allocation5 + $0x70] sm:$0xff]
    %v141 = vld [vmem:[#allocation5 + $0x78] sm:$0xff]
    %v142 = vld [vmem:[#allocation5 + $0x80] sm:$0xff]
    %v143 = vld [vmem:[#allocation5 + $0x88] sm:$0xff]
    %v144 = vld [vmem:[#allocation5 + $0x90] sm:$0xff]
    %v145 = vld [vmem:[#allocation5 + $0x98] sm:$0xff]
    %v146 = vld [vmem:[#allocation5 + $0xa0] sm:$0xff]
    %v147 = vld [vmem:[#allocation5 + $0xa8] sm:$0xff]
    %v148 = vld [vmem:[#allocation5 + $0xb0] sm:$0xff]
    %v149 = vld [vmem:[#allocation5 + $0xb8] sm:$0xff]
    %v150 = vld [vmem:[#allocation5 + $0xc0] sm:$0xff]
    %v151 = vld [vmem:[#allocation5 + $0xc8] sm:$0xff]
    %v152 = vld [vmem:[#allocation5 + $0xd0] sm:$0xff]
    %v153 = vld [vmem:[#allocation5 + $0xd8] sm:$0xff]
    %v154 = vld [vmem:[#allocation5 + $0xe0] sm:$0xff]
    %v155 = vld [vmem:[#allocation5 + $0xe8] sm:$0xff]
    %v156 = vld [vmem:[#allocation5 + $0xf0] sm:$0xff]
    %v157 = vld [vmem:[#allocation5 + $0xf8] sm:$0xff]
    %v158 = vld [vmem:[#allocation5 + $0x100] sm:$0xff]
    %v159 = vld [vmem:[#allocation5 + $0x108] sm:$0xff]
    %v160 = vld [vmem:[#allocation5 + $0x110] sm:$0xff]
    %v161 = vld [vmem:[#allocation5 + $0x118] sm:$0xff]
    %v162 = vld [vmem:[#allocation5 + $0x120] sm:$0xff]
    %v163 = vld [vmem:[#allocation5 + $0x128] sm:$0xff]
    %v164 = vld [vmem:[#allocation5 + $0x130] sm:$0xff]
    %v165 = vld [vmem:[#allocation5 + $0x138] sm:$0xff]
    %v166 = vld [vmem:[#allocation5 + $0x140] sm:$0xff]
    %v167 = vld [vmem:[#allocation5 + $0x148] sm:$0xff]
    %v168 = vld [vmem:[#allocation5 + $0x150] sm:$0xff]
    %v169 = vld [vmem:[#allocation5 + $0x158] sm:$0xff]
    %v170 = vld [vmem:[#allocation5 + $0x160] sm:$0xff]
    %v171 = vld [vmem:[#allocation5 + $0x168] sm:$0xff]
    %v172 = vld [vmem:[#allocation5 + $0x170] sm:$0xff]
    %v173 = vld [vmem:[#allocation5 + $0x178] sm:$0xff]
    %v174 = vld [vmem:[#allocation5 + $0x180] sm:$0xff]
    %v175 = vld [vmem:[#allocation5 + $0x188] sm:$0xff]
    %v176 = vld [vmem:[#allocation5 + $0x190] sm:$0xff]
    %v177 = vld [vmem:[#allocation5 + $0x198] sm:$0xff]
    %v178 = vld [vmem:[#allocation5 + $0x1a0] sm:$0xff]
    %v179 = vld [vmem:[#allocation5 + $0x1a8] sm:$0xff]
    %v180 = vld [vmem:[#allocation5 + $0x1b0] sm:$0xff]
    %v181 = vld [vmem:[#allocation5 + $0x1b8] sm:$0xff]
    %v182 = vld [vmem:[#allocation5 + $0x1c0] sm:$0xff]
    %v183 = vld [vmem:[#allocation5 + $0x1c8] sm:$0xff]
    %v184 = vld [vmem:[#allocation5 + $0x1d0] sm:$0xff]
    %v185 = vld [vmem:[#allocation5 + $0x1d8] sm:$0xff]
    %v186 = vld [vmem:[#allocation5 + $0x1e0] sm:$0xff]
    %v187 = vld [vmem:[#allocation5 + $0x1e8] sm:$0xff]
    %v188 = vld [vmem:[#allocation5 + $0x1f0] sm:$0xff]
    %v189 = vld [vmem:[#allocation5 + $0x1f8] sm:$0xff]
    %v190 = vld [vmem:[#allocation5 + $0x200] sm:$0xff]
    %v191 = vld [vmem:[#allocation5 + $0x208] sm:$0xff]
    %v192 = vld [vmem:[#allocation5 + $0x210] sm:$0xff]
    %v193 = vld [vmem:[#allocation5 + $0x218] sm:$0xff]
    %v194 = vld [vmem:[#allocation5 + $0x220] sm:$0xff]
    %v195 = vld [vmem:[#allocation5 + $0x228] sm:$0xff]
    %v196 = vld [vmem:[#allocation5 + $0x230] sm:$0xff]
    %v197 = vld [vmem:[#allocation5 + $0x238] sm:$0xff]
    %v198 = vld [vmem:[#allocation5 + $0x240] sm:$0xff]
    %v199 = vld [vmem:[#allocation5 + $0x248] sm:$0xff]
    %v200 = vld [vmem:[#allocation5 + $0x250] sm:$0xff]
    %v201 = vld [vmem:[#allocation5 + $0x258] sm:$0xff]
    %v202 = vld [vmem:[#allocation5 + $0x260] sm:$0xff]
    %v203 = vld [vmem:[#allocation5 + $0x268] sm:$0xff]
    %v204 = vld [vmem:[#allocation5 + $0x270] sm:$0xff]
    %v205 = vld [vmem:[#allocation5 + $0x278] sm:$0xff]
    %v206 = vld [vmem:[#allocation5 + $0x280] sm:$0xff]
    %v207 = vld [vmem:[#allocation5 + $0x288] sm:$0xff]
    %v208 = vld [vmem:[#allocation5 + $0x290] sm:$0xff]
    %v209 = vld [vmem:[#allocation5 + $0x298] sm:$0xff]
    %v210 = vld [vmem:[#allocation5 + $0x2a0] sm:$0xff]
    %v211 = vld [vmem:[#allocation5 + $0x2a8] sm:$0xff]
    %v212 = vld [vmem:[#allocation5 + $0x2b0] sm:$0xff]
    %v213 = vld [vmem:[#allocation5 + $0x2b8] sm:$0xff]
    %v214 = vld [vmem:[#allocation5 + $0x2c0] sm:$0xff]
    %v215 = vld [vmem:[#allocation5 + $0x2c8] sm:$0xff]
    %v216 = vld [vmem:[#allocation5 + $0x2d0] sm:$0xff]
    %v217 = vld [vmem:[#allocation5 + $0x2d8] sm:$0xff]
    %v218 = vld [vmem:[#allocation5 + $0x2e0] sm:$0xff]
    %v219 = vld [vmem:[#allocation5 + $0x2e8] sm:$0xff]
    %v220 = vld [vmem:[#allocation5 + $0x2f0] sm:$0xff]
    %v221 = vld [vmem:[#allocation5 + $0x2f8] sm:$0xff]
    %v222 = vld [vmem:[#allocation5 + $0x300] sm:$0xff]
    %v223 = vld [vmem:[#allocation5 + $0x308] sm:$0xff]
    %v224 = vld [vmem:[#allocation5 + $0x310] sm:$0xff]
    %v225 = vld [vmem:[#allocation5 + $0x318] sm:$0xff]
    %v226 = vld [vmem:[#allocation5 + $0x320] sm:$0xff]
    %v227 = vld [vmem:[#allocation5 + $0x328] sm:$0xff]
    %v228 = vld [vmem:[#allocation5 + $0x330] sm:$0xff]
    %v229 = vld [vmem:[#allocation5 + $0x338] sm:$0xff]
    %v230 = vld [vmem:[#allocation5 + $0x340] sm:$0xff]
    %v231 = vld [vmem:[#allocation5 + $0x348] sm:$0xff]
    %v232 = vld [vmem:[#allocation5 + $0x350] sm:$0xff]
    %v233 = vld [vmem:[#allocation5 + $0x358] sm:$0xff]
    %v234 = vld [vmem:[#allocation5 + $0x360] sm:$0xff]
    %v235 = vld [vmem:[#allocation5 + $0x368] sm:$0xff]
    %v236 = vld [vmem:[#allocation5 + $0x370] sm:$0xff]
    %v237 = vld [vmem:[#allocation5 + $0x378] sm:$0xff]
    %v238 = vld [vmem:[#allocation5 + $0x380] sm:$0xff]
    %v239 = vld [vmem:[#allocation5 + $0x388] sm:$0xff]
    %v240 = vld [vmem:[#allocation5 + $0x390] sm:$0xff]
    %v241 = vld [vmem:[#allocation5 + $0x398] sm:$0xff]
    %v242 = vld [vmem:[#allocation5 + $0x3a0] sm:$0xff]
    %v243 = vld [vmem:[#allocation5 + $0x3a8] sm:$0xff]
    %v244 = vld [vmem:[#allocation5 + $0x3b0] sm:$0xff]
    %v245 = vld [vmem:[#allocation5 + $0x3b8] sm:$0xff]
    %v246 = vld [vmem:[#allocation5 + $0x3c0] sm:$0xff]
    %v247 = vld [vmem:[#allocation5 + $0x3c8] sm:$0xff]
    %v248 = vld [vmem:[#allocation5 + $0x3d0] sm:$0xff]
    %v249 = vld [vmem:[#allocation5 + $0x3d8] sm:$0xff]
    %v250 = vld [vmem:[#allocation5 + $0x3e0] sm:$0xff]
    %v251 = vld [vmem:[#allocation5 + $0x3e8] sm:$0xff]
    %v252 = vld [vmem:[#allocation5 + $0x3f0] sm:$0xff]
    %v253 = vld [vmem:[#allocation5 + $0x3f8] sm:$0xff]
    %v254 = vld [vmem:[#allocation7] sm:$0x3]
    %v256 = vperm.slane %v254, 0
    %v257 = vperm.slane %v254, 1
    %v268 = vunpack.c.l.b16 %v118
    %v269 = vunpack.c.h.b16 %v118
    %v270 = vunpack.c.l.b16 %v119
    %v271 = vunpack.c.h.b16 %v119
    %v272 = vunpack.c.l.b16 %v120
    %v273 = vunpack.c.h.b16 %v120
    %v274 = vunpack.c.l.b16 %v121
    %v275 = vunpack.c.h.b16 %v121
    %v276 = vunpack.c.l.b16 %v122
    %v277 = vunpack.c.h.b16 %v122
    %v278 = vunpack.c.l.b16 %v123
    %v279 = vunpack.c.h.b16 %v123
    %v280 = vunpack.c.l.b16 %v124
    %v281 = vunpack.c.h.b16 %v124
    %v282 = vunpack.c.l.b16 %v125
    %v283 = vunpack.c.h.b16 %v125
    %v284 = vpack.c.b16 %v276, %v268
    %v285 = vpack.c.b16 %v277, %v269
    %v286 = vpack.c.b16 %v278, %v270
    %v287 = vpack.c.b16 %v279, %v271
    %v288 = vpack.c.b16 %v280, %v272
    %v289 = vpack.c.b16 %v281, %v273
    %v290 = vpack.c.b16 %v282, %v274
    %v291 = vpack.c.b16 %v283, %v275
    %v428 = vunpack.c.l.b16 %v126
    %v429 = vunpack.c.h.b16 %v126
    %v430 = vunpack.c.l.b16 %v127
    %v431 = vunpack.c.h.b16 %v127
    %v432 = vunpack.c.l.b16 %v128
    %v433 = vunpack.c.h.b16 %v128
    %v434 = vunpack.c.l.b16 %v129
    %v435 = vunpack.c.h.b16 %v129
    %v436 = vunpack.c.l.b16 %v130
    %v437 = vunpack.c.h.b16 %v130
    %v438 = vunpack.c.l.b16 %v131
    %v439 = vunpack.c.h.b16 %v131
    %v440 = vunpack.c.l.b16 %v132
    %v441 = vunpack.c.h.b16 %v132
    %v442 = vunpack.c.l.b16 %v133
    %v443 = vunpack.c.h.b16 %v133
    %v444 = vunpack.c.l.b16 %v134
    %v445 = vunpack.c.h.b16 %v134
    %v446 = vunpack.c.l.b16 %v135
    %v447 = vunpack.c.h.b16 %v135
    %v448 = vunpack.c.l.b16 %v136
    %v449 = vunpack.c.h.b16 %v136
    %v450 = vunpack.c.l.b16 %v137
    %v451 = vunpack.c.h.b16 %v137
    %v452 = vunpack.c.l.b16 %v138
    %v453 = vunpack.c.h.b16 %v138
    %v454 = vunpack.c.l.b16 %v139
    %v455 = vunpack.c.h.b16 %v139
    %v456 = vunpack.c.l.b16 %v140
    %v457 = vunpack.c.h.b16 %v140
    %v458 = vunpack.c.l.b16 %v141
    %v459 = vunpack.c.h.b16 %v141
    %v460 = vunpack.c.l.b16 %v142
    %v461 = vunpack.c.h.b16 %v142
    %v462 = vunpack.c.l.b16 %v143
    %v463 = vunpack.c.h.b16 %v143
    %v464 = vunpack.c.l.b16 %v144
    %v465 = vunpack.c.h.b16 %v144
    %v466 = vunpack.c.l.b16 %v145
    %v467 = vunpack.c.h.b16 %v145
    %v468 = vunpack.c.l.b16 %v146
    %v469 = vunpack.c.h.b16 %v146
    %v470 = vunpack.c.l.b16 %v147
    %v471 = vunpack.c.h.b16 %v147
    %v472 = vunpack.c.l.b16 %v148
    %v473 = vunpack.c.h.b16 %v148
    %v474 = vunpack.c.l.b16 %v149
    %v475 = vunpack.c.h.b16 %v149
    %v476 = vunpack.c.l.b16 %v150
    %v477 = vunpack.c.h.b16 %v150
    %v478 = vunpack.c.l.b16 %v151
    %v479 = vunpack.c.h.b16 %v151
    %v480 = vunpack.c.l.b16 %v152
    %v481 = vunpack.c.h.b16 %v152
    %v482 = vunpack.c.l.b16 %v153
    %v483 = vunpack.c.h.b16 %v153
    %v484 = vunpack.c.l.b16 %v154
    %v485 = vunpack.c.h.b16 %v154
    %v486 = vunpack.c.l.b16 %v155
    %v487 = vunpack.c.h.b16 %v155
    %v488 = vunpack.c.l.b16 %v156
    %v489 = vunpack.c.h.b16 %v156
    %v490 = vunpack.c.l.b16 %v157
    %v491 = vunpack.c.h.b16 %v157
    %v492 = vunpack.c.l.b16 %v158
    %v493 = vunpack.c.h.b16 %v158
    %v494 = vunpack.c.l.b16 %v159
    %v495 = vunpack.c.h.b16 %v159
    %v496 = vunpack.c.l.b16 %v160
    %v497 = vunpack.c.h.b16 %v160
    %v498 = vunpack.c.l.b16 %v161
    %v499 = vunpack.c.h.b16 %v161
    %v500 = vunpack.c.l.b16 %v162
    %v501 = vunpack.c.h.b16 %v162
    %v502 = vunpack.c.l.b16 %v163
    %v503 = vunpack.c.h.b16 %v163
    %v504 = vunpack.c.l.b16 %v164
    %v505 = vunpack.c.h.b16 %v164
    %v506 = vunpack.c.l.b16 %v165
    %v507 = vunpack.c.h.b16 %v165
    %v508 = vunpack.c.l.b16 %v166
    %v509 = vunpack.c.h.b16 %v166
    %v510 = vunpack.c.l.b16 %v167
    %v511 = vunpack.c.h.b16 %v167
    %v512 = vunpack.c.l.b16 %v168
    %v513 = vunpack.c.h.b16 %v168
    %v514 = vunpack.c.l.b16 %v169
    %v515 = vunpack.c.h.b16 %v169
    %v516 = vunpack.c.l.b16 %v170
    %v517 = vunpack.c.h.b16 %v170
    %v518 = vunpack.c.l.b16 %v171
    %v519 = vunpack.c.h.b16 %v171
    %v520 = vunpack.c.l.b16 %v172
    %v521 = vunpack.c.h.b16 %v172
    %v522 = vunpack.c.l.b16 %v173
    %v523 = vunpack.c.h.b16 %v173
    %v524 = vunpack.c.l.b16 %v174
    %v525 = vunpack.c.h.b16 %v174
    %v526 = vunpack.c.l.b16 %v175
    %v527 = vunpack.c.h.b16 %v175
    %v528 = vunpack.c.l.b16 %v176
    %v529 = vunpack.c.h.b16 %v176
    %v530 = vunpack.c.l.b16 %v177
    %v531 = vunpack.c.h.b16 %v177
    %v532 = vunpack.c.l.b16 %v178
    %v533 = vunpack.c.h.b16 %v178
    %v534 = vunpack.c.l.b16 %v179
    %v535 = vunpack.c.h.b16 %v179
    %v536 = vunpack.c.l.b16 %v180
    %v537 = vunpack.c.h.b16 %v180
    %v538 = vunpack.c.l.b16 %v181
    %v539 = vunpack.c.h.b16 %v181
    %v540 = vunpack.c.l.b16 %v182
    %v541 = vunpack.c.h.b16 %v182
    %v542 = vunpack.c.l.b16 %v183
    %v543 = vunpack.c.h.b16 %v183
    %v544 = vunpack.c.l.b16 %v184
    %v545 = vunpack.c.h.b16 %v184
    %v546 = vunpack.c.l.b16 %v185
    %v547 = vunpack.c.h.b16 %v185
    %v548 = vunpack.c.l.b16 %v186
    %v549 = vunpack.c.h.b16 %v186
    %v550 = vunpack.c.l.b16 %v187
    %v551 = vunpack.c.h.b16 %v187
    %v552 = vunpack.c.l.b16 %v188
    %v553 = vunpack.c.h.b16 %v188
    %v554 = vunpack.c.l.b16 %v189
    %v555 = vunpack.c.h.b16 %v189
    %v556 = vunpack.c.l.b16 %v190
    %v557 = vunpack.c.h.b16 %v190
    %v558 = vunpack.c.l.b16 %v191
    %v559 = vunpack.c.h.b16 %v191
    %v560 = vunpack.c.l.b16 %v192
    %v561 = vunpack.c.h.b16 %v192
    %v562 = vunpack.c.l.b16 %v193
    %v563 = vunpack.c.h.b16 %v193
    %v564 = vunpack.c.l.b16 %v194
    %v565 = vunpack.c.h.b16 %v194
    %v566 = vunpack.c.l.b16 %v195
    %v567 = vunpack.c.h.b16 %v195
    %v568 = vunpack.c.l.b16 %v196
    %v569 = vunpack.c.h.b16 %v196
    %v570 = vunpack.c.l.b16 %v197
    %v571 = vunpack.c.h.b16 %v197
    %v572 = vunpack.c.l.b16 %v198
    %v573 = vunpack.c.h.b16 %v198
    %v574 = vunpack.c.l.b16 %v199
    %v575 = vunpack.c.h.b16 %v199
    %v576 = vunpack.c.l.b16 %v200
    %v577 = vunpack.c.h.b16 %v200
    %v578 = vunpack.c.l.b16 %v201
    %v579 = vunpack.c.h.b16 %v201
    %v580 = vunpack.c.l.b16 %v202
    %v581 = vunpack.c.h.b16 %v202
    %v582 = vunpack.c.l.b16 %v203
    %v583 = vunpack.c.h.b16 %v203
    %v584 = vunpack.c.l.b16 %v204
    %v585 = vunpack.c.h.b16 %v204
    %v586 = vunpack.c.l.b16 %v205
    %v587 = vunpack.c.h.b16 %v205
    %v588 = vunpack.c.l.b16 %v206
    %v589 = vunpack.c.h.b16 %v206
    %v590 = vunpack.c.l.b16 %v207
    %v591 = vunpack.c.h.b16 %v207
    %v592 = vunpack.c.l.b16 %v208
    %v593 = vunpack.c.h.b16 %v208
    %v594 = vunpack.c.l.b16 %v209
    %v595 = vunpack.c.h.b16 %v209
    %v596 = vunpack.c.l.b16 %v210
    %v597 = vunpack.c.h.b16 %v210
    %v598 = vunpack.c.l.b16 %v211
    %v599 = vunpack.c.h.b16 %v211
    %v600 = vunpack.c.l.b16 %v212
    %v601 = vunpack.c.h.b16 %v212
    %v602 = vunpack.c.l.b16 %v213
    %v603 = vunpack.c.h.b16 %v213
    %v604 = vunpack.c.l.b16 %v214
    %v605 = vunpack.c.h.b16 %v214
    %v606 = vunpack.c.l.b16 %v215
    %v607 = vunpack.c.h.b16 %v215
    %v608 = vunpack.c.l.b16 %v216
    %v609 = vunpack.c.h.b16 %v216
    %v610 = vunpack.c.l.b16 %v217
    %v611 = vunpack.c.h.b16 %v217
    %v612 = vunpack.c.l.b16 %v218
    %v613 = vunpack.c.h.b16 %v218
    %v614 = vunpack.c.l.b16 %v219
    %v615 = vunpack.c.h.b16 %v219
    %v616 = vunpack.c.l.b16 %v220
    %v617 = vunpack.c.h.b16 %v220
    %v618 = vunpack.c.l.b16 %v221
    %v619 = vunpack.c.h.b16 %v221
    %v620 = vunpack.c.l.b16 %v222
    %v621 = vunpack.c.h.b16 %v222
    %v622 = vunpack.c.l.b16 %v223
    %v623 = vunpack.c.h.b16 %v223
    %v624 = vunpack.c.l.b16 %v224
    %v625 = vunpack.c.h.b16 %v224
    %v626 = vunpack.c.l.b16 %v225
    %v627 = vunpack.c.h.b16 %v225
    %v628 = vunpack.c.l.b16 %v226
    %v629 = vunpack.c.h.b16 %v226
    %v630 = vunpack.c.l.b16 %v227
    %v631 = vunpack.c.h.b16 %v227
    %v632 = vunpack.c.l.b16 %v228
    %v633 = vunpack.c.h.b16 %v228
    %v634 = vunpack.c.l.b16 %v229
    %v635 = vunpack.c.h.b16 %v229
    %v636 = vunpack.c.l.b16 %v230
    %v637 = vunpack.c.h.b16 %v230
    %v638 = vunpack.c.l.b16 %v231
    %v639 = vunpack.c.h.b16 %v231
    %v640 = vunpack.c.l.b16 %v232
    %v641 = vunpack.c.h.b16 %v232
    %v642 = vunpack.c.l.b16 %v233
    %v643 = vunpack.c.h.b16 %v233
    %v644 = vunpack.c.l.b16 %v234
    %v645 = vunpack.c.h.b16 %v234
    %v646 = vunpack.c.l.b16 %v235
    %v647 = vunpack.c.h.b16 %v235
    %v648 = vunpack.c.l.b16 %v236
    %v649 = vunpack.c.h.b16 %v236
    %v650 = vunpack.c.l.b16 %v237
    %v651 = vunpack.c.h.b16 %v237
    %v652 = vunpack.c.l.b16 %v238
    %v653 = vunpack.c.h.b16 %v238
    %v654 = vunpack.c.l.b16 %v239
    %v655 = vunpack.c.h.b16 %v239
    %v656 = vunpack.c.l.b16 %v240
    %v657 = vunpack.c.h.b16 %v240
    %v658 = vunpack.c.l.b16 %v241
    %v659 = vunpack.c.h.b16 %v241
    %v660 = vunpack.c.l.b16 %v242
    %v661 = vunpack.c.h.b16 %v242
    %v662 = vunpack.c.l.b16 %v243
    %v663 = vunpack.c.h.b16 %v243
    %v664 = vunpack.c.l.b16 %v244
    %v665 = vunpack.c.h.b16 %v244
    %v666 = vunpack.c.l.b16 %v245
    %v667 = vunpack.c.h.b16 %v245
    %v668 = vunpack.c.l.b16 %v246
    %v669 = vunpack.c.h.b16 %v246
    %v670 = vunpack.c.l.b16 %v247
    %v671 = vunpack.c.h.b16 %v247
    %v672 = vunpack.c.l.b16 %v248
    %v673 = vunpack.c.h.b16 %v248
    %v674 = vunpack.c.l.b16 %v249
    %v675 = vunpack.c.h.b16 %v249
    %v676 = vunpack.c.l.b16 %v250
    %v677 = vunpack.c.h.b16 %v250
    %v678 = vunpack.c.l.b16 %v251
    %v679 = vunpack.c.h.b16 %v251
    %v680 = vunpack.c.l.b16 %v252
    %v681 = vunpack.c.h.b16 %v252
    %v682 = vunpack.c.l.b16 %v253
    %v683 = vunpack.c.h.b16 %v253
    %v684 = vpack.c.b16 %v430, %v428
    %v685 = vpack.c.b16 %v431, %v429
    %v686 = vpack.c.b16 %v434, %v432
    %v687 = vpack.c.b16 %v435, %v433
    %v688 = vpack.c.b16 %v438, %v436
    %v689 = vpack.c.b16 %v439, %v437
    %v690 = vpack.c.b16 %v442, %v440
    %v691 = vpack.c.b16 %v443, %v441
    %v692 = vpack.c.b16 %v446, %v444
    %v693 = vpack.c.b16 %v447, %v445
    %v694 = vpack.c.b16 %v450, %v448
    %v695 = vpack.c.b16 %v451, %v449
    %v696 = vpack.c.b16 %v454, %v452
    %v697 = vpack.c.b16 %v455, %v453
    %v698 = vpack.c.b16 %v458, %v456
    %v699 = vpack.c.b16 %v459, %v457
    %v700 = vpack.c.b16 %v462, %v460
    %v701 = vpack.c.b16 %v463, %v461
    %v702 = vpack.c.b16 %v466, %v464
    %v703 = vpack.c.b16 %v467, %v465
    %v704 = vpack.c.b16 %v470, %v468
    %v705 = vpack.c.b16 %v471, %v469
    %v706 = vpack.c.b16 %v474, %v472
    %v707 = vpack.c.b16 %v475, %v473
    %v708 = vpack.c.b16 %v478, %v476
    %v709 = vpack.c.b16 %v479, %v477
    %v710 = vpack.c.b16 %v482, %v480
    %v711 = vpack.c.b16 %v483, %v481
    %v712 = vpack.c.b16 %v486, %v484
    %v713 = vpack.c.b16 %v487, %v485
    %v714 = vpack.c.b16 %v490, %v488
    %v715 = vpack.c.b16 %v491, %v489
    %v716 = vpack.c.b16 %v494, %v492
    %v717 = vpack.c.b16 %v495, %v493
    %v718 = vpack.c.b16 %v498, %v496
    %v719 = vpack.c.b16 %v499, %v497
    %v720 = vpack.c.b16 %v502, %v500
    %v721 = vpack.c.b16 %v503, %v501
    %v722 = vpack.c.b16 %v506, %v504
    %v723 = vpack.c.b16 %v507, %v505
    %v724 = vpack.c.b16 %v510, %v508
    %v725 = vpack.c.b16 %v511, %v509
    %v726 = vpack.c.b16 %v514, %v512
    %v727 = vpack.c.b16 %v515, %v513
    %v728 = vpack.c.b16 %v518, %v516
    %v729 = vpack.c.b16 %v519, %v517
    %v730 = vpack.c.b16 %v522, %v520
    %v731 = vpack.c.b16 %v523, %v521
    %v732 = vpack.c.b16 %v526, %v524
    %v733 = vpack.c.b16 %v527, %v525
    %v734 = vpack.c.b16 %v530, %v528
    %v735 = vpack.c.b16 %v531, %v529
    %v736 = vpack.c.b16 %v534, %v532
    %v737 = vpack.c.b16 %v535, %v533
    %v738 = vpack.c.b16 %v538, %v536
    %v739 = vpack.c.b16 %v539, %v537
    %v740 = vpack.c.b16 %v542, %v540
    %v741 = vpack.c.b16 %v543, %v541
    %v742 = vpack.c.b16 %v546, %v544
    %v743 = vpack.c.b16 %v547, %v545
    %v744 = vpack.c.b16 %v550, %v548
    %v745 = vpack.c.b16 %v551, %v549
    %v746 = vpack.c.b16 %v554, %v552
    %v747 = vpack.c.b16 %v555, %v553
    %v748 = vpack.c.b16 %v558, %v556
    %v749 = vpack.c.b16 %v559, %v557
    %v750 = vpack.c.b16 %v562, %v560
    %v751 = vpack.c.b16 %v563, %v561
    %v752 = vpack.c.b16 %v566, %v564
    %v753 = vpack.c.b16 %v567, %v565
    %v754 = vpack.c.b16 %v570, %v568
    %v755 = vpack.c.b16 %v571, %v569
    %v756 = vpack.c.b16 %v574, %v572
    %v757 = vpack.c.b16 %v575, %v573
    %v758 = vpack.c.b16 %v578, %v576
    %v759 = vpack.c.b16 %v579, %v577
    %v760 = vpack.c.b16 %v582, %v580
    %v761 = vpack.c.b16 %v583, %v581
    %v762 = vpack.c.b16 %v586, %v584
    %v763 = vpack.c.b16 %v587, %v585
    %v764 = vpack.c.b16 %v590, %v588
    %v765 = vpack.c.b16 %v591, %v589
    %v766 = vpack.c.b16 %v594, %v592
    %v767 = vpack.c.b16 %v595, %v593
    %v768 = vpack.c.b16 %v598, %v596
    %v769 = vpack.c.b16 %v599, %v597
    %v770 = vpack.c.b16 %v602, %v600
    %v771 = vpack.c.b16 %v603, %v601
    %v772 = vpack.c.b16 %v606, %v604
    %v773 = vpack.c.b16 %v607, %v605
    %v774 = vpack.c.b16 %v610, %v608
    %v775 = vpack.c.b16 %v611, %v609
    %v776 = vpack.c.b16 %v614, %v612
    %v777 = vpack.c.b16 %v615, %v613
    %v778 = vpack.c.b16 %v618, %v616
    %v779 = vpack.c.b16 %v619, %v617
    %v780 = vpack.c.b16 %v622, %v620
    %v781 = vpack.c.b16 %v623, %v621
    %v782 = vpack.c.b16 %v626, %v624
    %v783 = vpack.c.b16 %v627, %v625
    %v784 = vpack.c.b16 %v630, %v628
    %v785 = vpack.c.b16 %v631, %v629
    %v786 = vpack.c.b16 %v634, %v632
    %v787 = vpack.c.b16 %v635, %v633
    %v788 = vpack.c.b16 %v638, %v636
    %v789 = vpack.c.b16 %v639, %v637
    %v790 = vpack.c.b16 %v642, %v640
    %v791 = vpack.c.b16 %v643, %v641
    %v792 = vpack.c.b16 %v646, %v644
    %v793 = vpack.c.b16 %v647, %v645
    %v794 = vpack.c.b16 %v650, %v648
    %v795 = vpack.c.b16 %v651, %v649
    %v796 = vpack.c.b16 %v654, %v652
    %v797 = vpack.c.b16 %v655, %v653
    %v798 = vpack.c.b16 %v658, %v656
    %v799 = vpack.c.b16 %v659, %v657
    %v800 = vpack.c.b16 %v662, %v660
    %v801 = vpack.c.b16 %v663, %v661
    %v802 = vpack.c.b16 %v666, %v664
    %v803 = vpack.c.b16 %v667, %v665
    %v804 = vpack.c.b16 %v670, %v668
    %v805 = vpack.c.b16 %v671, %v669
    %v806 = vpack.c.b16 %v674, %v672
    %v807 = vpack.c.b16 %v675, %v673
    %v808 = vpack.c.b16 %v678, %v676
    %v809 = vpack.c.b16 %v679, %v677
    %v810 = vpack.c.b16 %v682, %v680
    %v811 = vpack.c.b16 %v683, %v681
    %940 = vmatpush.bf16.msra.mxu0 %v698
    %941 = vmatpush.bf16.msra.mxu0 %v696
    %942 = vmatpush.bf16.msra.mxu0 %v694
    %943 = vmatpush.bf16.msra.mxu0 %v692
    %944 = vmatpush.bf16.msra.mxu0 %v690
    %945 = vmatpush.bf16.msra.mxu0 %v688
    %946 = vmatpush.bf16.msra.mxu0 %v686
    %947 = vmatpush.bf16.msra.mxu0 %v684
    %948 = vmatmul.bf16.gmra.mxu0 %v284
    %v949 = vpop.f32.mrf.mxu0
    %v950 = vadd.f32 %v256, %v949
    %v951 = vpop.f32.mrf.mxu0
    %v952 = vadd.f32 %v256, %v951
    %953 = vdwg.mxu0
    %954 = vmatpush.bf16.msra.mxu0 %v714
    %955 = vmatpush.bf16.msra.mxu0 %v712
    %956 = vmatpush.bf16.msra.mxu0 %v710
    %957 = vmatpush.bf16.msra.mxu0 %v708
    %958 = vmatpush.bf16.msra.mxu0 %v706
    %959 = vmatpush.bf16.msra.mxu0 %v704
    %960 = vmatpush.bf16.msra.mxu0 %v702
    %961 = vmatpush.bf16.msra.mxu0 %v700
    %962 = vmatmul.bf16.gmra.mxu0 %v285
    %v963 = vpop.f32.mrf.mxu0
    %v964 = vadd.f32 %v950, %v963
    %v965 = vpop.f32.mrf.mxu0
    %v966 = vadd.f32 %v952, %v965
    %967 = vdwg.mxu0
    %968 = vmatpush.bf16.msra.mxu0 %v730
    %969 = vmatpush.bf16.msra.mxu0 %v728
    %970 = vmatpush.bf16.msra.mxu0 %v726
    %971 = vmatpush.bf16.msra.mxu0 %v724
    %972 = vmatpush.bf16.msra.mxu0 %v722
    %973 = vmatpush.bf16.msra.mxu0 %v720
    %974 = vmatpush.bf16.msra.mxu0 %v718
    %975 = vmatpush.bf16.msra.mxu0 %v716
    %976 = vmatmul.bf16.gmra.mxu0 %v286
    %v977 = vpop.f32.mrf.mxu0
    %v978 = vadd.f32 %v964, %v977
    %v979 = vpop.f32.mrf.mxu0
    %v980 = vadd.f32 %v966, %v979
    %981 = vdwg.mxu0
    %982 = vmatpush.bf16.msra.mxu0 %v746
    %983 = vmatpush.bf16.msra.mxu0 %v744
    %984 = vmatpush.bf16.msra.mxu0 %v742
    %985 = vmatpush.bf16.msra.mxu0 %v740
    %986 = vmatpush.bf16.msra.mxu0 %v738
    %987 = vmatpush.bf16.msra.mxu0 %v736
    %988 = vmatpush.bf16.msra.mxu0 %v734
    %989 = vmatpush.bf16.msra.mxu0 %v732
    %990 = vmatmul.bf16.gmra.mxu0 %v287
    %v991 = vpop.f32.mrf.mxu0
    %v992 = vadd.f32 %v978, %v991
    %v993 = vpop.f32.mrf.mxu0
    %v994 = vadd.f32 %v980, %v993
    %995 = vdwg.mxu0
    %996 = vmatpush.bf16.msra.mxu0 %v762
    %997 = vmatpush.bf16.msra.mxu0 %v760
    %998 = vmatpush.bf16.msra.mxu0 %v758
    %999 = vmatpush.bf16.msra.mxu0 %v756
    %1000 = vmatpush.bf16.msra.mxu0 %v754
    %1001 = vmatpush.bf16.msra.mxu0 %v752
    %1002 = vmatpush.bf16.msra.mxu0 %v750
    %1003 = vmatpush.bf16.msra.mxu0 %v748
    %1004 = vmatmul.bf16.gmra.mxu0 %v288
    %v1005 = vpop.f32.mrf.mxu0
    %v1006 = vadd.f32 %v992, %v1005
    %v1007 = vpop.f32.mrf.mxu0
    %v1008 = vadd.f32 %v994, %v1007
    %1009 = vdwg.mxu0
    %1010 = vmatpush.bf16.msra.mxu0 %v778
    %1011 = vmatpush.bf16.msra.mxu0 %v776
    %1012 = vmatpush.bf16.msra.mxu0 %v774
    %1013 = vmatpush.bf16.msra.mxu0 %v772
    %1014 = vmatpush.bf16.msra.mxu0 %v770
    %1015 = vmatpush.bf16.msra.mxu0 %v768
    %1016 = vmatpush.bf16.msra.mxu0 %v766
    %1017 = vmatpush.bf16.msra.mxu0 %v764
    %1018 = vmatmul.bf16.gmra.mxu0 %v289
    %v1019 = vpop.f32.mrf.mxu0
    %v1020 = vadd.f32 %v1006, %v1019
    %v1021 = vpop.f32.mrf.mxu0
    %v1022 = vadd.f32 %v1008, %v1021
    %1023 = vdwg.mxu0
    %1024 = vmatpush.bf16.msra.mxu0 %v794
    %1025 = vmatpush.bf16.msra.mxu0 %v792
    %1026 = vmatpush.bf16.msra.mxu0 %v790
    %1027 = vmatpush.bf16.msra.mxu0 %v788
    %1028 = vmatpush.bf16.msra.mxu0 %v786
    %1029 = vmatpush.bf16.msra.mxu0 %v784
    %1030 = vmatpush.bf16.msra.mxu0 %v782
    %1031 = vmatpush.bf16.msra.mxu0 %v780
    %1032 = vmatmul.bf16.gmra.mxu0 %v290
    %v1033 = vpop.f32.mrf.mxu0
    %v1034 = vadd.f32 %v1020, %v1033
    %v1035 = vpop.f32.mrf.mxu0
    %v1036 = vadd.f32 %v1022, %v1035
    %1037 = vdwg.mxu0
    %1038 = vmatpush.bf16.msra.mxu0 %v810
    %1039 = vmatpush.bf16.msra.mxu0 %v808
    %1040 = vmatpush.bf16.msra.mxu0 %v806
    %1041 = vmatpush.bf16.msra.mxu0 %v804
    %1042 = vmatpush.bf16.msra.mxu0 %v802
    %1043 = vmatpush.bf16.msra.mxu0 %v800
    %1044 = vmatpush.bf16.msra.mxu0 %v798
    %1045 = vmatpush.bf16.msra.mxu0 %v796
    %1046 = vmatmul.bf16.gmra.mxu0 %v291
    %v1047 = vpop.f32.mrf.mxu0
    %v1048 = vadd.f32 %v1034, %v1047
    %v1049 = vpop.f32.mrf.mxu0
    %v1050 = vadd.f32 %v1036, %v1049
    %1051 = vdwg.mxu0
    %1052 = vmatpush.bf16.msra.mxu0 %v699
    %1053 = vmatpush.bf16.msra.mxu0 %v697
    %1054 = vmatpush.bf16.msra.mxu0 %v695
    %1055 = vmatpush.bf16.msra.mxu0 %v693
    %1056 = vmatpush.bf16.msra.mxu0 %v691
    %1057 = vmatpush.bf16.msra.mxu0 %v689
    %1058 = vmatpush.bf16.msra.mxu0 %v687
    %1059 = vmatpush.bf16.msra.mxu0 %v685
    %1060 = vmatmul.bf16.gmra.mxu0 %v284
    %v1061 = vpop.f32.mrf.mxu0
    %v1062 = vadd.f32 %v257, %v1061
    %v1063 = vpop.f32.mrf.mxu0
    %v1064 = vadd.f32 %v257, %v1063
    %1065 = vdwg.mxu0
    %1066 = vmatpush.bf16.msra.mxu0 %v715
    %1067 = vmatpush.bf16.msra.mxu0 %v713
    %1068 = vmatpush.bf16.msra.mxu0 %v711
    %1069 = vmatpush.bf16.msra.mxu0 %v709
    %1070 = vmatpush.bf16.msra.mxu0 %v707
    %1071 = vmatpush.bf16.msra.mxu0 %v705
    %1072 = vmatpush.bf16.msra.mxu0 %v703
    %1073 = vmatpush.bf16.msra.mxu0 %v701
    %1074 = vmatmul.bf16.gmra.mxu0 %v285
    %v1075 = vpop.f32.mrf.mxu0
    %v1076 = vadd.f32 %v1062, %v1075
    %v1077 = vpop.f32.mrf.mxu0
    %v1078 = vadd.f32 %v1064, %v1077
    %1079 = vdwg.mxu0
    %1080 = vmatpush.bf16.msra.mxu0 %v731
    %1081 = vmatpush.bf16.msra.mxu0 %v729
    %1082 = vmatpush.bf16.msra.mxu0 %v727
    %1083 = vmatpush.bf16.msra.mxu0 %v725
    %1084 = vmatpush.bf16.msra.mxu0 %v723
    %1085 = vmatpush.bf16.msra.mxu0 %v721
    %1086 = vmatpush.bf16.msra.mxu0 %v719
    %1087 = vmatpush.bf16.msra.mxu0 %v717
    %1088 = vmatmul.bf16.gmra.mxu0 %v286
    %v1089 = vpop.f32.mrf.mxu0
    %v1090 = vadd.f32 %v1076, %v1089
    %v1091 = vpop.f32.mrf.mxu0
    %v1092 = vadd.f32 %v1078, %v1091
    %1093 = vdwg.mxu0
    %1094 = vmatpush.bf16.msra.mxu0 %v747
    %1095 = vmatpush.bf16.msra.mxu0 %v745
    %1096 = vmatpush.bf16.msra.mxu0 %v743
    %1097 = vmatpush.bf16.msra.mxu0 %v741
    %1098 = vmatpush.bf16.msra.mxu0 %v739
    %1099 = vmatpush.bf16.msra.mxu0 %v737
    %1100 = vmatpush.bf16.msra.mxu0 %v735
    %1101 = vmatpush.bf16.msra.mxu0 %v733
    %1102 = vmatmul.bf16.gmra.mxu0 %v287
    %v1103 = vpop.f32.mrf.mxu0
    %v1104 = vadd.f32 %v1090, %v1103
    %v1105 = vpop.f32.mrf.mxu0
    %v1106 = vadd.f32 %v1092, %v1105
    %1107 = vdwg.mxu0
    %1108 = vmatpush.bf16.msra.mxu0 %v763
    %1109 = vmatpush.bf16.msra.mxu0 %v761
    %1110 = vmatpush.bf16.msra.mxu0 %v759
    %1111 = vmatpush.bf16.msra.mxu0 %v757
    %1112 = vmatpush.bf16.msra.mxu0 %v755
    %1113 = vmatpush.bf16.msra.mxu0 %v753
    %1114 = vmatpush.bf16.msra.mxu0 %v751
    %1115 = vmatpush.bf16.msra.mxu0 %v749
    %1116 = vmatmul.bf16.gmra.mxu0 %v288
    %v1117 = vpop.f32.mrf.mxu0
    %v1118 = vadd.f32 %v1104, %v1117
    %v1119 = vpop.f32.mrf.mxu0
    %v1120 = vadd.f32 %v1106, %v1119
    %1121 = vdwg.mxu0
    %1122 = vmatpush.bf16.msra.mxu0 %v779
    %1123 = vmatpush.bf16.msra.mxu0 %v777
    %1124 = vmatpush.bf16.msra.mxu0 %v775
    %1125 = vmatpush.bf16.msra.mxu0 %v773
    %1126 = vmatpush.bf16.msra.mxu0 %v771
    %1127 = vmatpush.bf16.msra.mxu0 %v769
    %1128 = vmatpush.bf16.msra.mxu0 %v767
    %1129 = vmatpush.bf16.msra.mxu0 %v765
    %1130 = vmatmul.bf16.gmra.mxu0 %v289
    %v1131 = vpop.f32.mrf.mxu0
    %v1132 = vadd.f32 %v1118, %v1131
    %v1133 = vpop.f32.mrf.mxu0
    %v1134 = vadd.f32 %v1120, %v1133
    %1135 = vdwg.mxu0
    %1136 = vmatpush.bf16.msra.mxu0 %v795
    %1137 = vmatpush.bf16.msra.mxu0 %v793
    %1138 = vmatpush.bf16.msra.mxu0 %v791
    %1139 = vmatpush.bf16.msra.mxu0 %v789
    %1140 = vmatpush.bf16.msra.mxu0 %v787
    %1141 = vmatpush.bf16.msra.mxu0 %v785
    %1142 = vmatpush.bf16.msra.mxu0 %v783
    %1143 = vmatpush.bf16.msra.mxu0 %v781
    %1144 = vmatmul.bf16.gmra.mxu0 %v290
    %v1145 = vpop.f32.mrf.mxu0
    %v1146 = vadd.f32 %v1132, %v1145
    %v1147 = vpop.f32.mrf.mxu0
    %v1148 = vadd.f32 %v1134, %v1147
    %1149 = vdwg.mxu0
    %1150 = vmatpush.bf16.msra.mxu0 %v811
    %1151 = vmatpush.bf16.msra.mxu0 %v809
    %1152 = vmatpush.bf16.msra.mxu0 %v807
    %1153 = vmatpush.bf16.msra.mxu0 %v805
    %1154 = vmatpush.bf16.msra.mxu0 %v803
    %1155 = vmatpush.bf16.msra.mxu0 %v801
    %1156 = vmatpush.bf16.msra.mxu0 %v799
    %1157 = vmatpush.bf16.msra.mxu0 %v797
    %1158 = vmatmul.bf16.gmra.mxu0 %v291
    %v1159 = vpop.f32.mrf.mxu0
    %v1160 = vadd.f32 %v1146, %v1159
    %v1161 = vpop.f32.mrf.mxu0
    %v1162 = vadd.f32 %v1148, %v1161
    %1163 = vdwg.mxu0
    %v1164 = vmul.f32 %v1160, 0.5
    %v1165 = vmul.f32 %v1162, 0.5
    %v1166 = vmul.f32 %v1164, 1.442695
    %v1167 = vpow.pop %v1166
    %v1168 = vmul.f32 %v1165, 1.442695
    %v1169 = vpow.pop %v1168
    %v1170 = vld [vmem:[#allocation11] sm:$0xff]
    %v1171 = vld [vmem:[#allocation11 + $0x8] sm:$0xff]
    %v1172 = vmul.f32 %v1167, %v1170
    %v1173 = vmul.f32 %v1169, %v1171
    %v1174 = vadd.f32 %v1048, %v1172
    %v1175 = vadd.f32 %v1050, %v1173
    %v1176 = vpack.c.bf16 %v1175, %v1174
    %v1177 = vld [vmem:[#allocation8] sm:$0xff]
    %v1178 = vld [vmem:[#allocation8 + $0x8] sm:$0xff]
    %v1179 = vld [vmem:[#allocation8 + $0x10] sm:$0xff]
    %v1180 = vld [vmem:[#allocation8 + $0x18] sm:$0xff]
    %v1181 = vld [vmem:[#allocation8 + $0x20] sm:$0xff]
    %v1182 = vld [vmem:[#allocation8 + $0x28] sm:$0xff]
    %v1183 = vld [vmem:[#allocation8 + $0x30] sm:$0xff]
    %v1184 = vld [vmem:[#allocation8 + $0x38] sm:$0xff]
    %v1185 = vld [vmem:[#allocation8 + $0x40] sm:$0xff]
    %v1186 = vld [vmem:[#allocation8 + $0x48] sm:$0xff]
    %v1187 = vld [vmem:[#allocation8 + $0x50] sm:$0xff]
    %v1188 = vld [vmem:[#allocation8 + $0x58] sm:$0xff]
    %v1189 = vld [vmem:[#allocation8 + $0x60] sm:$0xff]
    %v1190 = vld [vmem:[#allocation8 + $0x68] sm:$0xff]
    %v1191 = vld [vmem:[#allocation8 + $0x70] sm:$0xff]
    %v1192 = vld [vmem:[#allocation8 + $0x78] sm:$0xff]
    %v1193 = vld [vmem:[#allocation8 + $0x80] sm:$0xff]
    %v1194 = vld [vmem:[#allocation8 + $0x88] sm:$0xff]
    %v1195 = vld [vmem:[#allocation8 + $0x90] sm:$0xff]
    %v1196 = vld [vmem:[#allocation8 + $0x98] sm:$0xff]
    %v1197 = vld [vmem:[#allocation8 + $0xa0] sm:$0xff]
    %v1198 = vld [vmem:[#allocation8 + $0xa8] sm:$0xff]
    %v1199 = vld [vmem:[#allocation8 + $0xb0] sm:$0xff]
    %v1200 = vld [vmem:[#allocation8 + $0xb8] sm:$0xff]
    %v1201 = vld [vmem:[#allocation8 + $0xc0] sm:$0xff]
    %v1202 = vld [vmem:[#allocation8 + $0xc8] sm:$0xff]
    %v1203 = vld [vmem:[#allocation8 + $0xd0] sm:$0xff]
    %v1204 = vld [vmem:[#allocation8 + $0xd8] sm:$0xff]
    %v1205 = vld [vmem:[#allocation8 + $0xe0] sm:$0xff]
    %v1206 = vld [vmem:[#allocation8 + $0xe8] sm:$0xff]
    %v1207 = vld [vmem:[#allocation8 + $0xf0] sm:$0xff]
    %v1208 = vld [vmem:[#allocation8 + $0xf8] sm:$0xff]
    %v1209 = vld [vmem:[#allocation8 + $0x100] sm:$0xff]
    %v1210 = vld [vmem:[#allocation8 + $0x108] sm:$0xff]
    %v1211 = vld [vmem:[#allocation8 + $0x110] sm:$0xff]
    %v1212 = vld [vmem:[#allocation8 + $0x118] sm:$0xff]
    %v1213 = vld [vmem:[#allocation8 + $0x120] sm:$0xff]
    %v1214 = vld [vmem:[#allocation8 + $0x128] sm:$0xff]
    %v1215 = vld [vmem:[#allocation8 + $0x130] sm:$0xff]
    %v1216 = vld [vmem:[#allocation8 + $0x138] sm:$0xff]
    %v1217 = vld [vmem:[#allocation8 + $0x140] sm:$0xff]
    %v1218 = vld [vmem:[#allocation8 + $0x148] sm:$0xff]
    %v1219 = vld [vmem:[#allocation8 + $0x150] sm:$0xff]
    %v1220 = vld [vmem:[#allocation8 + $0x158] sm:$0xff]
    %v1221 = vld [vmem:[#allocation8 + $0x160] sm:$0xff]
    %v1222 = vld [vmem:[#allocation8 + $0x168] sm:$0xff]
    %v1223 = vld [vmem:[#allocation8 + $0x170] sm:$0xff]
    %v1224 = vld [vmem:[#allocation8 + $0x178] sm:$0xff]
    %v1225 = vld [vmem:[#allocation8 + $0x180] sm:$0xff]
    %v1226 = vld [vmem:[#allocation8 + $0x188] sm:$0xff]
    %v1227 = vld [vmem:[#allocation8 + $0x190] sm:$0xff]
    %v1228 = vld [vmem:[#allocation8 + $0x198] sm:$0xff]
    %v1229 = vld [vmem:[#allocation8 + $0x1a0] sm:$0xff]
    %v1230 = vld [vmem:[#allocation8 + $0x1a8] sm:$0xff]
    %v1231 = vld [vmem:[#allocation8 + $0x1b0] sm:$0xff]
    %v1232 = vld [vmem:[#allocation8 + $0x1b8] sm:$0xff]
    %v1233 = vld [vmem:[#allocation8 + $0x1c0] sm:$0xff]
    %v1234 = vld [vmem:[#allocation8 + $0x1c8] sm:$0xff]
    %v1235 = vld [vmem:[#allocation8 + $0x1d0] sm:$0xff]
    %v1236 = vld [vmem:[#allocation8 + $0x1d8] sm:$0xff]
    %v1237 = vld [vmem:[#allocation8 + $0x1e0] sm:$0xff]
    %v1238 = vld [vmem:[#allocation8 + $0x1e8] sm:$0xff]
    %v1239 = vld [vmem:[#allocation8 + $0x1f0] sm:$0xff]
    %v1240 = vld [vmem:[#allocation8 + $0x1f8] sm:$0xff]
    %v1241 = vld [vmem:[#allocation10] sm:$0xff]
    %v1243 = vperm.slane %v1241, 0
    %v1244 = vperm.slane %v1241, 1
    %v1245 = vperm.slane %v1241, 2
    %v1246 = vperm.slane %v1241, 3
    %v1247 = vperm.slane %v1241, 4
    %v1248 = vperm.slane %v1241, 5
    %v1249 = vperm.slane %v1241, 6
    %v1250 = vperm.slane %v1241, 7
    %v1323 = vunpack.c.l.b16 %v1177
    %v1324 = vunpack.c.h.b16 %v1177
    %v1325 = vunpack.c.l.b16 %v1178
    %v1326 = vunpack.c.h.b16 %v1178
    %v1327 = vunpack.c.l.b16 %v1179
    %v1328 = vunpack.c.h.b16 %v1179
    %v1329 = vunpack.c.l.b16 %v1180
    %v1330 = vunpack.c.h.b16 %v1180
    %v1331 = vunpack.c.l.b16 %v1181
    %v1332 = vunpack.c.h.b16 %v1181
    %v1333 = vunpack.c.l.b16 %v1182
    %v1334 = vunpack.c.h.b16 %v1182
    %v1335 = vunpack.c.l.b16 %v1183
    %v1336 = vunpack.c.h.b16 %v1183
    %v1337 = vunpack.c.l.b16 %v1184
    %v1338 = vunpack.c.h.b16 %v1184
    %v1339 = vunpack.c.l.b16 %v1185
    %v1340 = vunpack.c.h.b16 %v1185
    %v1341 = vunpack.c.l.b16 %v1186
    %v1342 = vunpack.c.h.b16 %v1186
    %v1343 = vunpack.c.l.b16 %v1187
    %v1344 = vunpack.c.h.b16 %v1187
    %v1345 = vunpack.c.l.b16 %v1188
    %v1346 = vunpack.c.h.b16 %v1188
    %v1347 = vunpack.c.l.b16 %v1189
    %v1348 = vunpack.c.h.b16 %v1189
    %v1349 = vunpack.c.l.b16 %v1190
    %v1350 = vunpack.c.h.b16 %v1190
    %v1351 = vunpack.c.l.b16 %v1191
    %v1352 = vunpack.c.h.b16 %v1191
    %v1353 = vunpack.c.l.b16 %v1192
    %v1354 = vunpack.c.h.b16 %v1192
    %v1355 = vunpack.c.l.b16 %v1193
    %v1356 = vunpack.c.h.b16 %v1193
    %v1357 = vunpack.c.l.b16 %v1194
    %v1358 = vunpack.c.h.b16 %v1194
    %v1359 = vunpack.c.l.b16 %v1195
    %v1360 = vunpack.c.h.b16 %v1195
    %v1361 = vunpack.c.l.b16 %v1196
    %v1362 = vunpack.c.h.b16 %v1196
    %v1363 = vunpack.c.l.b16 %v1197
    %v1364 = vunpack.c.h.b16 %v1197
    %v1365 = vunpack.c.l.b16 %v1198
    %v1366 = vunpack.c.h.b16 %v1198
    %v1367 = vunpack.c.l.b16 %v1199
    %v1368 = vunpack.c.h.b16 %v1199
    %v1369 = vunpack.c.l.b16 %v1200
    %v1370 = vunpack.c.h.b16 %v1200
    %v1371 = vunpack.c.l.b16 %v1201
    %v1372 = vunpack.c.h.b16 %v1201
    %v1373 = vunpack.c.l.b16 %v1202
    %v1374 = vunpack.c.h.b16 %v1202
    %v1375 = vunpack.c.l.b16 %v1203
    %v1376 = vunpack.c.h.b16 %v1203
    %v1377 = vunpack.c.l.b16 %v1204
    %v1378 = vunpack.c.h.b16 %v1204
    %v1379 = vunpack.c.l.b16 %v1205
    %v1380 = vunpack.c.h.b16 %v1205
    %v1381 = vunpack.c.l.b16 %v1206
    %v1382 = vunpack.c.h.b16 %v1206
    %v1383 = vunpack.c.l.b16 %v1207
    %v1384 = vunpack.c.h.b16 %v1207
    %v1385 = vunpack.c.l.b16 %v1208
    %v1386 = vunpack.c.h.b16 %v1208
    %v1387 = vunpack.c.l.b16 %v1209
    %v1388 = vunpack.c.h.b16 %v1209
    %v1389 = vunpack.c.l.b16 %v1210
    %v1390 = vunpack.c.h.b16 %v1210
    %v1391 = vunpack.c.l.b16 %v1211
    %v1392 = vunpack.c.h.b16 %v1211
    %v1393 = vunpack.c.l.b16 %v1212
    %v1394 = vunpack.c.h.b16 %v1212
    %v1395 = vunpack.c.l.b16 %v1213
    %v1396 = vunpack.c.h.b16 %v1213
    %v1397 = vunpack.c.l.b16 %v1214
    %v1398 = vunpack.c.h.b16 %v1214
    %v1399 = vunpack.c.l.b16 %v1215
    %v1400 = vunpack.c.h.b16 %v1215
    %v1401 = vunpack.c.l.b16 %v1216
    %v1402 = vunpack.c.h.b16 %v1216
    %v1403 = vunpack.c.l.b16 %v1217
    %v1404 = vunpack.c.h.b16 %v1217
    %v1405 = vunpack.c.l.b16 %v1218
    %v1406 = vunpack.c.h.b16 %v1218
    %v1407 = vunpack.c.l.b16 %v1219
    %v1408 = vunpack.c.h.b16 %v1219
    %v1409 = vunpack.c.l.b16 %v1220
    %v1410 = vunpack.c.h.b16 %v1220
    %v1411 = vunpack.c.l.b16 %v1221
    %v1412 = vunpack.c.h.b16 %v1221
    %v1413 = vunpack.c.l.b16 %v1222
    %v1414 = vunpack.c.h.b16 %v1222
    %v1415 = vunpack.c.l.b16 %v1223
    %v1416 = vunpack.c.h.b16 %v1223
    %v1417 = vunpack.c.l.b16 %v1224
    %v1418 = vunpack.c.h.b16 %v1224
    %v1419 = vunpack.c.l.b16 %v1225
    %v1420 = vunpack.c.h.b16 %v1225
    %v1421 = vunpack.c.l.b16 %v1226
    %v1422 = vunpack.c.h.b16 %v1226
    %v1423 = vunpack.c.l.b16 %v1227
    %v1424 = vunpack.c.h.b16 %v1227
    %v1425 = vunpack.c.l.b16 %v1228
    %v1426 = vunpack.c.h.b16 %v1228
    %v1427 = vunpack.c.l.b16 %v1229
    %v1428 = vunpack.c.h.b16 %v1229
    %v1429 = vunpack.c.l.b16 %v1230
    %v1430 = vunpack.c.h.b16 %v1230
    %v1431 = vunpack.c.l.b16 %v1231
    %v1432 = vunpack.c.h.b16 %v1231
    %v1433 = vunpack.c.l.b16 %v1232
    %v1434 = vunpack.c.h.b16 %v1232
    %v1435 = vunpack.c.l.b16 %v1233
    %v1436 = vunpack.c.h.b16 %v1233
    %v1437 = vunpack.c.l.b16 %v1234
    %v1438 = vunpack.c.h.b16 %v1234
    %v1439 = vunpack.c.l.b16 %v1235
    %v1440 = vunpack.c.h.b16 %v1235
    %v1441 = vunpack.c.l.b16 %v1236
    %v1442 = vunpack.c.h.b16 %v1236
    %v1443 = vunpack.c.l.b16 %v1237
    %v1444 = vunpack.c.h.b16 %v1237
    %v1445 = vunpack.c.l.b16 %v1238
    %v1446 = vunpack.c.h.b16 %v1238
    %v1447 = vunpack.c.l.b16 %v1239
    %v1448 = vunpack.c.h.b16 %v1239
    %v1449 = vunpack.c.l.b16 %v1240
    %v1450 = vunpack.c.h.b16 %v1240
    %v1451 = vpack.c.b16 %v1331, %v1323
    %v1452 = vpack.c.b16 %v1332, %v1324
    %v1453 = vpack.c.b16 %v1333, %v1325
    %v1454 = vpack.c.b16 %v1334, %v1326
    %v1455 = vpack.c.b16 %v1335, %v1327
    %v1456 = vpack.c.b16 %v1336, %v1328
    %v1457 = vpack.c.b16 %v1337, %v1329
    %v1458 = vpack.c.b16 %v1338, %v1330
    %v1459 = vpack.c.b16 %v1347, %v1339
    %v1460 = vpack.c.b16 %v1348, %v1340
    %v1461 = vpack.c.b16 %v1349, %v1341
    %v1462 = vpack.c.b16 %v1350, %v1342
    %v1463 = vpack.c.b16 %v1351, %v1343
    %v1464 = vpack.c.b16 %v1352, %v1344
    %v1465 = vpack.c.b16 %v1353, %v1345
    %v1466 = vpack.c.b16 %v1354, %v1346
    %v1467 = vpack.c.b16 %v1363, %v1355
    %v1468 = vpack.c.b16 %v1364, %v1356
    %v1469 = vpack.c.b16 %v1365, %v1357
    %v1470 = vpack.c.b16 %v1366, %v1358
    %v1471 = vpack.c.b16 %v1367, %v1359
    %v1472 = vpack.c.b16 %v1368, %v1360
    %v1473 = vpack.c.b16 %v1369, %v1361
    %v1474 = vpack.c.b16 %v1370, %v1362
    %v1475 = vpack.c.b16 %v1379, %v1371
    %v1476 = vpack.c.b16 %v1380, %v1372
    %v1477 = vpack.c.b16 %v1381, %v1373
    %v1478 = vpack.c.b16 %v1382, %v1374
    %v1479 = vpack.c.b16 %v1383, %v1375
    %v1480 = vpack.c.b16 %v1384, %v1376
    %v1481 = vpack.c.b16 %v1385, %v1377
    %v1482 = vpack.c.b16 %v1386, %v1378
    %v1483 = vpack.c.b16 %v1395, %v1387
    %v1484 = vpack.c.b16 %v1396, %v1388
    %v1485 = vpack.c.b16 %v1397, %v1389
    %v1486 = vpack.c.b16 %v1398, %v1390
    %v1487 = vpack.c.b16 %v1399, %v1391
    %v1488 = vpack.c.b16 %v1400, %v1392
    %v1489 = vpack.c.b16 %v1401, %v1393
    %v1490 = vpack.c.b16 %v1402, %v1394
    %v1491 = vpack.c.b16 %v1411, %v1403
    %v1492 = vpack.c.b16 %v1412, %v1404
    %v1493 = vpack.c.b16 %v1413, %v1405
    %v1494 = vpack.c.b16 %v1414, %v1406
    %v1495 = vpack.c.b16 %v1415, %v1407
    %v1496 = vpack.c.b16 %v1416, %v1408
    %v1497 = vpack.c.b16 %v1417, %v1409
    %v1498 = vpack.c.b16 %v1418, %v1410
    %v1499 = vpack.c.b16 %v1427, %v1419
    %v1500 = vpack.c.b16 %v1428, %v1420
    %v1501 = vpack.c.b16 %v1429, %v1421
    %v1502 = vpack.c.b16 %v1430, %v1422
    %v1503 = vpack.c.b16 %v1431, %v1423
    %v1504 = vpack.c.b16 %v1432, %v1424
    %v1505 = vpack.c.b16 %v1433, %v1425
    %v1506 = vpack.c.b16 %v1434, %v1426
    %v1507 = vpack.c.b16 %v1443, %v1435
    %v1508 = vpack.c.b16 %v1444, %v1436
    %v1509 = vpack.c.b16 %v1445, %v1437
    %v1510 = vpack.c.b16 %v1446, %v1438
    %v1511 = vpack.c.b16 %v1447, %v1439
    %v1512 = vpack.c.b16 %v1448, %v1440
    %v1513 = vpack.c.b16 %v1449, %v1441
    %v1514 = vpack.c.b16 %v1450, %v1442
    %1579 = vmatpush.bf16.msra.mxu0 %v1507
    %1580 = vmatpush.bf16.msra.mxu0 %v1499
    %1581 = vmatpush.bf16.msra.mxu0 %v1491
    %1582 = vmatpush.bf16.msra.mxu0 %v1483
    %1583 = vmatpush.bf16.msra.mxu0 %v1475
    %1584 = vmatpush.bf16.msra.mxu0 %v1467
    %1585 = vmatpush.bf16.msra.mxu0 %v1459
    %1586 = vmatpush.bf16.msra.mxu0 %v1451
    %1587 = vmatmul.bf16.gmra.mxu0 %v1176
    %v1588 = vpop.f32.mrf.mxu0
    %v1589 = vadd.f32 %v1243, %v1588
    %v1590 = vpop.f32.mrf.mxu0
    %v1591 = vadd.f32 %v1243, %v1590
    %1592 = vdwg.mxu0
    %1593 = vmatpush.bf16.msra.mxu0 %v1508
    %1594 = vmatpush.bf16.msra.mxu0 %v1500
    %1595 = vmatpush.bf16.msra.mxu0 %v1492
    %1596 = vmatpush.bf16.msra.mxu0 %v1484
    %1597 = vmatpush.bf16.msra.mxu0 %v1476
    %1598 = vmatpush.bf16.msra.mxu0 %v1468
    %1599 = vmatpush.bf16.msra.mxu0 %v1460
    %1600 = vmatpush.bf16.msra.mxu0 %v1452
    %1601 = vmatmul.bf16.gmra.mxu0 %v1176
    %v1602 = vpop.f32.mrf.mxu0
    %v1603 = vadd.f32 %v1244, %v1602
    %v1604 = vpop.f32.mrf.mxu0
    %v1605 = vadd.f32 %v1244, %v1604
    %1606 = vdwg.mxu0
    %1607 = vmatpush.bf16.msra.mxu0 %v1509
    %1608 = vmatpush.bf16.msra.mxu0 %v1501
    %1609 = vmatpush.bf16.msra.mxu0 %v1493
    %1610 = vmatpush.bf16.msra.mxu0 %v1485
    %1611 = vmatpush.bf16.msra.mxu0 %v1477
    %1612 = vmatpush.bf16.msra.mxu0 %v1469
    %1613 = vmatpush.bf16.msra.mxu0 %v1461
    %1614 = vmatpush.bf16.msra.mxu0 %v1453
    %1615 = vmatmul.bf16.gmra.mxu0 %v1176
    %v1616 = vpop.f32.mrf.mxu0
    %v1617 = vadd.f32 %v1245, %v1616
    %v1618 = vpop.f32.mrf.mxu0
    %v1619 = vadd.f32 %v1245, %v1618
    %1620 = vdwg.mxu0
    %1621 = vmatpush.bf16.msra.mxu0 %v1510
    %1622 = vmatpush.bf16.msra.mxu0 %v1502
    %1623 = vmatpush.bf16.msra.mxu0 %v1494
    %1624 = vmatpush.bf16.msra.mxu0 %v1486
    %1625 = vmatpush.bf16.msra.mxu0 %v1478
    %1626 = vmatpush.bf16.msra.mxu0 %v1470
    %1627 = vmatpush.bf16.msra.mxu0 %v1462
    %1628 = vmatpush.bf16.msra.mxu0 %v1454
    %1629 = vmatmul.bf16.gmra.mxu0 %v1176
    %v1630 = vpop.f32.mrf.mxu0
    %v1631 = vadd.f32 %v1246, %v1630
    %v1632 = vpop.f32.mrf.mxu0
    %v1633 = vadd.f32 %v1246, %v1632
    %1634 = vdwg.mxu0
    %1635 = vmatpush.bf16.msra.mxu0 %v1511
    %1636 = vmatpush.bf16.msra.mxu0 %v1503
    %1637 = vmatpush.bf16.msra.mxu0 %v1495
    %1638 = vmatpush.bf16.msra.mxu0 %v1487
    %1639 = vmatpush.bf16.msra.mxu0 %v1479
    %1640 = vmatpush.bf16.msra.mxu0 %v1471
    %1641 = vmatpush.bf16.msra.mxu0 %v1463
    %1642 = vmatpush.bf16.msra.mxu0 %v1455
    %1643 = vmatmul.bf16.gmra.mxu0 %v1176
    %v1644 = vpop.f32.mrf.mxu0
    %v1645 = vadd.f32 %v1247, %v1644
    %v1646 = vpop.f32.mrf.mxu0
    %v1647 = vadd.f32 %v1247, %v1646
    %1648 = vdwg.mxu0
    %1649 = vmatpush.bf16.msra.mxu0 %v1512
    %1650 = vmatpush.bf16.msra.mxu0 %v1504
    %1651 = vmatpush.bf16.msra.mxu0 %v1496
    %1652 = vmatpush.bf16.msra.mxu0 %v1488
    %1653 = vmatpush.bf16.msra.mxu0 %v1480
    %1654 = vmatpush.bf16.msra.mxu0 %v1472
    %1655 = vmatpush.bf16.msra.mxu0 %v1464
    %1656 = vmatpush.bf16.msra.mxu0 %v1456
    %1657 = vmatmul.bf16.gmra.mxu0 %v1176
    %v1658 = vpop.f32.mrf.mxu0
    %v1659 = vadd.f32 %v1248, %v1658
    %v1660 = vpop.f32.mrf.mxu0
    %v1661 = vadd.f32 %v1248, %v1660
    %1662 = vdwg.mxu0
    %1663 = vmatpush.bf16.msra.mxu0 %v1513
    %1664 = vmatpush.bf16.msra.mxu0 %v1505
    %1665 = vmatpush.bf16.msra.mxu0 %v1497
    %1666 = vmatpush.bf16.msra.mxu0 %v1489
    %1667 = vmatpush.bf16.msra.mxu0 %v1481
    %1668 = vmatpush.bf16.msra.mxu0 %v1473
    %1669 = vmatpush.bf16.msra.mxu0 %v1465
    %1670 = vmatpush.bf16.msra.mxu0 %v1457
    %1671 = vmatmul.bf16.gmra.mxu0 %v1176
    %v1672 = vpop.f32.mrf.mxu0
    %v1673 = vadd.f32 %v1249, %v1672
    %v1674 = vpop.f32.mrf.mxu0
    %v1675 = vadd.f32 %v1249, %v1674
    %1676 = vdwg.mxu0
    %1677 = vmatpush.bf16.msra.mxu0 %v1514
    %1678 = vmatpush.bf16.msra.mxu0 %v1506
    %1679 = vmatpush.bf16.msra.mxu0 %v1498
    %1680 = vmatpush.bf16.msra.mxu0 %v1490
    %1681 = vmatpush.bf16.msra.mxu0 %v1482
    %1682 = vmatpush.bf16.msra.mxu0 %v1474
    %1683 = vmatpush.bf16.msra.mxu0 %v1466
    %1684 = vmatpush.bf16.msra.mxu0 %v1458
    %1685 = vmatmul.bf16.gmra.mxu0 %v1176
    %v1686 = vpop.f32.mrf.mxu0
    %v1687 = vadd.f32 %v1250, %v1686
    %v1688 = vpop.f32.mrf.mxu0
    %v1689 = vadd.f32 %v1250, %v1688
    %1690 = vdwg.mxu0
    %1691 = vst [vmem:[#allocation13] sm:$0xff] %v1589
    %1692 = vst [vmem:[#allocation13 + $0x8] sm:$0xff] %v1603
    %1693 = vst [vmem:[#allocation13 + $0x10] sm:$0xff] %v1617
    %1694 = vst [vmem:[#allocation13 + $0x18] sm:$0xff] %v1631
    %1695 = vst [vmem:[#allocation13 + $0x20] sm:$0xff] %v1645
    %1696 = vst [vmem:[#allocation13 + $0x28] sm:$0xff] %v1659
    %1697 = vst [vmem:[#allocation13 + $0x30] sm:$0xff] %v1673
    %1698 = vst [vmem:[#allocation13 + $0x38] sm:$0xff] %v1687
    %1699 = vst [vmem:[#allocation13 + $0x40] sm:$0xff] %v1591
    %1700 = vst [vmem:[#allocation13 + $0x48] sm:$0xff] %v1605
    %1701 = vst [vmem:[#allocation13 + $0x50] sm:$0xff] %v1619
    %1702 = vst [vmem:[#allocation13 + $0x58] sm:$0xff] %v1633
    %1703 = vst [vmem:[#allocation13 + $0x60] sm:$0xff] %v1647
    %1704 = vst [vmem:[#allocation13 + $0x68] sm:$0xff] %v1661
    %1705 = vst [vmem:[#allocation13 + $0x70] sm:$0xff] %v1675
    %1706 = vst [vmem:[#allocation13 + $0x78] sm:$0xff] %v1689
    %1707 = vst [vmem:[#allocation14] sm:$0xff] %v1048
    %1708 = vst [vmem:[#allocation14 + $0x8] sm:$0xff] %v1050
    %1709 = vst [vmem:[#allocation16] sm:$0xff] %v1160
    %1710 = vst [vmem:[#allocation16 + $0x8] sm:$0xff] %v1162
    // Predicated region
    $region50: #{tpu_custom_call.1} parent=1 // pred_check
      _
    $region51: #{tpu_custom_call.1} parent=1 // pred_check_branch
      %1712 = sbr.rel (0) target = $region53
    $region52: #{tpu_custom_call.1} parent=1 // pred_region
      %1714 = vsyncadd [#allocation4], 0
      %s1715 = sshll.u32 [#allocation13], 4
      %s1716 = int_to_ptr.vmem [resolvable:$true] %s1715
      %s1717 = sshll.u32 %s6, 4
      %s1718 = int_to_ptr.hbm [resolvable:$true] %s1717
      %1723 = dma.vmem_to_hbm [thread:$0]  %s1716, 2048, %s1718, [#allocation4], 1024, 1024, 64
    $region53: #{tpu_custom_call.1} parent=1 // pred_fallthru
      _
    // Predicated region
    $region54: #{tpu_custom_call.1} parent=1 // pred_check
      _
    $region55: #{tpu_custom_call.1} parent=1 // pred_check_branch
      %1725 = sbr.rel (0) target = $region57
    $region56: #{tpu_custom_call.1} parent=1 // pred_region
      %1727 = vsyncadd [#allocation15], 0
      %s1728 = sshll.u32 [#allocation14], 4
      %s1729 = int_to_ptr.vmem [resolvable:$true] %s1728
      %s1730 = sshll.u32 %s7, 4
      %s1731 = int_to_ptr.hbm [resolvable:$true] %s1730
      %1736 = dma.vmem_to_hbm [thread:$0]  %s1729, 256, %s1731, [#allocation15], 128, 128, 8
    $region57: #{tpu_custom_call.1} parent=1 // pred_fallthru
      _
    // Predicated region
    $region58: #{tpu_custom_call.1} parent=1 // pred_check
      _
    $region59: #{tpu_custom_call.1} parent=1 // pred_check_branch
      %1738 = sbr.rel (0) target = $region61
    $region60: #{tpu_custom_call.1} parent=1 // pred_region
      %1740 = vsyncadd [#allocation15], 0
      %s1741 = sshll.u32 [#allocation16], 4
      %s1742 = int_to_ptr.vmem [resolvable:$true] %s1741
      %s1743 = sshll.u32 %s8, 4
      %s1744 = int_to_ptr.hbm [resolvable:$true] %s1743
      %1749 = dma.vmem_to_hbm [thread:$0]  %s1742, 256, %s1744, [#allocation15], 128, 128, 8
    $region61: #{tpu_custom_call.1} parent=1 // pred_fallthru
      _
    // Predicated region
    $region62: #{tpu_custom_call.1} parent=1 // pred_check
      _
    $region63: #{tpu_custom_call.1} parent=1 // pred_check_branch
      %1751 = sbr.rel (0) target = $region65
    $region64: #{tpu_custom_call.1} parent=1 // pred_region
      %1753 = dma.done [#allocation4], 2048
    $region65: #{tpu_custom_call.1} parent=1 // pred_fallthru
      _
    // Predicated region
    $region66: #{tpu_custom_call.1} parent=1 // pred_check
      _
    $region67: #{tpu_custom_call.1} parent=1 // pred_check_branch
      %1755 = sbr.rel (0) target = $region69
    $region68: #{tpu_custom_call.1} parent=1 // pred_region
      %1757 = dma.done [#allocation15], 256
    $region69: #{tpu_custom_call.1} parent=1 // pred_fallthru
      _
    // Predicated region
    $region70: #{tpu_custom_call.1} parent=1 // pred_check
      _
    $region71: #{tpu_custom_call.1} parent=1 // pred_check_branch
      %1759 = sbr.rel (0) target = $region73
    $region72: #{tpu_custom_call.1} parent=1 // pred_region
      %1761 = dma.done [#allocation15], 256
    $region73: #{tpu_custom_call.1} parent=1 // pred_fallthru
      _
    %1762 = vsyncpa [#allocation3], 1
    %1763 = vsyncpa [#allocation6], 1
    %1764 = vsyncpa [#allocation9], 1
    %1765 = vsyncpa [#allocation12], 1
    %1766 = vsyncpa [#allocation4], 1
    %1767 = vsyncpa [#allocation15], 1

</llo_original>
